<compile_context>
chip_gen: v5e
topology: v5e:2x2
jax: 0.10.0
libtpu: 0.0.40
codegen_flags: <defaults>
</compile_context>

<pallas_src>
import functools

import jax
import jax.numpy as jnp
from jax.experimental import pallas as pl
from jax.experimental.pallas import tpu as pltpu


# ---------------------------------------------------------------------------
# Fused kernel: conv1 -> relu -> conv2 -> relu -> flatten -> fc1 -> relu ->
# fc2 -> relu -> fc3, for one tile of `batch_tile` graphs per grid step.
#
# Node rows are (graph, node)-major: row = b*N + n.  Pair rows are
# (graph, target i, source j)-major: p = (b*N + i)*N + j, so per-graph views
# are plain leading-dim reshapes and the softmax over sources j is a reduce
# over the second-minor axis.
# ---------------------------------------------------------------------------
def _fs_graph_conv_kernel(
        x_ref, e_ref,
        we1_ref, we2_ref,
        wl1_ref, bl1_ref, wr1_ref, br1_ref, attb1_ref, eexp1_ref, bias1_ref,
        wl2_ref, bl2_ref, wr2_ref, br2_ref, attb2_ref, eexp2_ref, bias2_ref,
        w1cat_ref, fc1m_ref, b1_ref, w2_ref, b2_ref, w3_ref, b3_ref,
        out_ref, *, n_nodes, batch_tile, edge_dim, hc1, hc2, heads1, heads2,
        negative_slope=0.2):
    f32 = jnp.float32
    N, Bt, E = n_nodes, batch_tile, edge_dim
    M = Bt * N                       # node rows in this tile
    P = Bt * N * N                   # pair rows in this tile

    x = x_ref[0]                     # [M, F]
    em = e_ref[0]                    # [P, E+1]; lane E = additive mask bias
    e = em[:, :E]                    # [P, E]
    maskb = em[:, E:E + 1]           # [P, 1]: 0 where edge, -1e30 where none

    # Edge projections for both layers (edge_attr is reused by conv2); the
    # shared e tile is loaded once, projected twice (no lane-offset slicing).
    ep1 = jnp.dot(e, we1_ref[...], preferred_element_type=f32)     # [P, hc1]
    ep2 = jnp.dot(e, we2_ref[...], preferred_element_type=f32)     # [P, hc2]

    def gatv2(xin, ep, wl, bl, wr, br, att_blk, eexp, bias, hc, heads):
        xl = jnp.dot(xin, wl, preferred_element_type=f32) + bl      # [M, hc] src
        xr = jnp.dot(xin, wr, preferred_element_type=f32) + br      # [M, hc] tgt
        # Node -> pair expansion via pure reshape/broadcast (no gather matmuls)
        xl4 = xl.reshape(Bt, N, hc)[:, None, :, :]    # (Bt, 1, N, hc) source j
        xr4 = xr.reshape(Bt, N, hc)[:, :, None, :]    # (Bt, N, 1, hc) target i
        t4 = xr4 + xl4 + ep.reshape(Bt, N, N, hc)     # (Bt, N, N, hc)
        t4 = jnp.where(t4 > 0, t4, negative_slope * t4)              # leaky_relu
        # All-heads scores via one block-diagonal att matmul + additive mask.
        s = jnp.dot(t4.reshape(P, hc), att_blk,
                    preferred_element_type=f32) + maskb              # [P, heads]
        # Softmax over sources j (groups of N consecutive pair rows).
        s3 = s.reshape(M, N, heads)
        mx = jnp.max(s3, axis=1, keepdims=True)
        p = jnp.exp(s3 - mx)
        denom = jnp.sum(p, axis=1, keepdims=True)
        alpha = p * pl.reciprocal(denom, approx=False)               # exact
        # TODO(synk): dropout(p=0.5) on alpha is training-only; eval-mode here.
        # Broadcast per-head alpha over its channels (one tiny matmul), weight
        # the source messages, and reduce over sources j (segmented reduce).
        ach = jnp.dot(alpha.reshape(P, heads), eexp,
                      preferred_element_type=f32)                    # [P, hc]
        w4 = ach.reshape(Bt, N, N, hc) * xl4                         # (Bt,N,N,hc)
        agg = jnp.sum(w4, axis=2).reshape(M, hc)                     # [M, hc]
        return jnp.maximum(agg + bias, 0.0)        # + bias, fused module ReLU

    h = gatv2(x, ep1, wl1_ref[...], bl1_ref[...], wr1_ref[...], br1_ref[...],
              attb1_ref[...], eexp1_ref[...], bias1_ref[...], hc1, heads1)
    h = gatv2(h, ep2, wl2_ref[...], bl2_ref[...], wr2_ref[...], br2_ref[...],
              attb2_ref[...], eexp2_ref[...], bias2_ref[...], hc2, heads2)

    # MLP head.  fc1 needs the per-graph flatten x.view(Bt, N*hc2); instead of
    # a sublane<->lane relayout we do one wide matmul against the per-node
    # column blocks of W1, mask the block diagonal, reduce over nodes (sublane
    # reduce) and sum the N lane blocks.
    d1 = b1_ref.shape[-1]                                            # 100
    nd = N * d1
    U = jnp.dot(h, w1cat_ref[...], preferred_element_type=f32)      # [M, N*d1]
    T = jnp.sum(U.reshape(Bt, N, nd) * fc1m_ref[...], axis=1)       # [Bt, N*d1]
    z = T[:, 0:d1]
    for n in range(1, N):
        z = z + T[:, n * d1:(n + 1) * d1]
    z = jnp.maximum(z + b1_ref[...], 0.0)
    z = jnp.maximum(
        jnp.dot(z, w2_ref[...], preferred_element_type=f32) + b2_ref[...], 0.0)
    z = jnp.dot(z, w3_ref[...], preferred_element_type=f32) + b3_ref[...]
    out_ref[0] = z.astype(out_ref.dtype)                            # [Bt, 1]


# ---------------------------------------------------------------------------
# Host-side helpers (tiny constants baked once, reused across grid steps).
# ---------------------------------------------------------------------------
def _att_blockdiag(att, heads, out_ch):
    # att: [1, heads*out_ch] -> block-diagonal [heads*out_ch, heads]
    hc = heads * out_ch
    idx = jnp.arange(hc)
    return jnp.zeros((hc, heads), jnp.float32).at[idx, idx // out_ch].set(att[0])


def _head_expand(heads, out_ch):
    # [heads, heads*out_ch] with E[h, h*C+c] = 1 (broadcast alpha over channels)
    hc = heads * out_ch
    return (jnp.arange(heads)[:, None]
            == (jnp.arange(hc) // out_ch)[None, :]).astype(jnp.float32)


def _fc1_blocks(w1, n_nodes, hc2, d1):
    # w1: [N*hc2, d1] (flatten index k = n*hc2 + c) ->
    #   w1cat   [hc2, N*d1] with w1cat[c, n*d1+o] = w1[n*hc2+c, o]
    #   fc1mask [N, N*d1]   block-diagonal selector
    w1cat = jnp.transpose(w1.reshape(n_nodes, hc2, d1),
                          (1, 0, 2)).reshape(hc2, n_nodes * d1)
    cols = jnp.arange(n_nodes * d1) // d1
    fc1mask = (jnp.arange(n_nodes)[:, None] == cols[None, :]).astype(jnp.float32)
    return w1cat, fc1mask


def _pick_batch_tile(B, N, vmem_budget_bytes=24 << 20):
    # Rough per-graph resident f32 bytes per grid step (lane-padded to 128,
    # inputs double-buffered, pair-space and row-space intermediates).
    per_graph = 4 * 128 * (2 * N          # x tile
                           + 2 * N * N    # edge+mask tile
                           + 8 * N * N    # pair-space intermediates
                           + 16 * N)      # row-space intermediates
    bt_max = max(1, vmem_budget_bytes // per_graph)
    bt = max(d for d in range(1, B + 1) if B % d == 0 and d <= bt_max)
    # Keep >= 2 grid steps when it costs nothing (v7x megacore: 2 TensorCores).
    if bt == B and B % 2 == 0 and B >= 2:
        bt = B // 2
    return bt


# ---------------------------------------------------------------------------
# Full forward (single fused pallas_call)
# ---------------------------------------------------------------------------
def fs_graph_conv_forward(x, edge_dense, mask, params, *, num_nodes,
                          batch_tile=None):
    B, N, F = x.shape
    assert N == num_nodes
    E = edge_dense.shape[-1]
    heads1, c1, heads2, c2 = 3, 3, 4, 5
    hc1, hc2 = heads1 * c1, heads2 * c2

    if batch_tile is None:
        batch_tile = _pick_batch_tile(B, N)
    assert B % batch_tile == 0
    Bt = batch_tile
    G = B // Bt
    M = Bt * N
    P = Bt * N * N

    wl1, bl1, wr1, br1, we1, att1, bias1 = params["conv1"]
    wl2, bl2, wr2, br2, we2, att2, bias2 = params["conv2"]
    w1, b1, w2, b2, w3, b3 = params["mlp"]
    d1 = b1.shape[-1]

    attb1, eexp1 = _att_blockdiag(att1, heads1, c1), _head_expand(heads1, c1)
    attb2, eexp2 = _att_blockdiag(att2, heads2, c2), _head_expand(heads2, c2)
    w1cat, fc1mask = _fc1_blocks(w1, N, hc2, d1)

    # Host-side layout: node rows (graph, node)-major (no transpose needed);
    # the additive mask bias rides in a spare lane of the edge tensor.
    x_g = x.reshape(G, M, F)
    bias_add = (-1e30) * (1.0 - mask.reshape(B, N, N, 1).astype(jnp.float32))
    e_in = jnp.concatenate([edge_dense, bias_add], axis=-1).reshape(G, P, E + 1)

    kernel = functools.partial(
        _fs_graph_conv_kernel, n_nodes=N, batch_tile=Bt, edge_dim=E,
        hc1=hc1, hc2=hc2, heads1=heads1, heads2=heads2)

    consts = (we1, we2,
              wl1, bl1, wr1, br1, attb1, eexp1, bias1,
              wl2, bl2, wr2, br2, attb2, eexp2, bias2,
              w1cat, fc1mask, b1, w2, b2, w3, b3)

    out = pl.pallas_call(
        kernel,
        out_shape=jax.ShapeDtypeStruct((G, Bt, 1), jnp.float32),
        grid=(G,),
        in_specs=[
            pl.BlockSpec((1, M, F), lambda g: (g, 0, 0)),
            pl.BlockSpec((1, P, E + 1), lambda g: (g, 0, 0)),
        ] + [pl.BlockSpec(c.shape, lambda g: (0, 0)) for c in consts],
        out_specs=pl.BlockSpec((1, Bt, 1), lambda g: (g, 0, 0)),
        compiler_params=pltpu.CompilerParams(
            dimension_semantics=("parallel",),
            vmem_limit_bytes=48 * 1024 * 1024),
    )(x_g, e_in, *consts)
    return out.reshape(B, 1)


# ---------------------------------------------------------------------------
# Graph densification (glue): matches PyG add_self_loops(fill_value='mean').
# NOTE: assumes the input graph has no pre-existing self loops (PyG removes
# them before adding the mean-filled ones).
# ---------------------------------------------------------------------------
def densify(edge_index, edge_attr, num_nodes):
    src, dst = edge_index[0], edge_index[1]
    E = edge_attr.shape[-1]
    mask = jnp.zeros((num_nodes, num_nodes), jnp.float32).at[dst, src].set(1.0)
    dense = jnp.zeros((num_nodes, num_nodes, E), jnp.float32).at[dst, src].set(edge_attr)
    deg = jnp.zeros((num_nodes,), jnp.float32).at[dst].add(1.0)
    sums = jnp.zeros((num_nodes, E), jnp.float32).at[dst].add(edge_attr)
    mean = sums / jnp.maximum(deg, 1.0)[:, None]        # self-loop edge_attr
    idx = jnp.arange(num_nodes)
    dense = dense.at[idx, idx].set(mean)
    mask = mask.at[idx, idx].set(1.0)
    return mask, dense


# ---------------------------------------------------------------------------
# Deterministic parameter init (synthetic; torch Linear weight is (out,in),
# here stored transposed as (in,out))
# ---------------------------------------------------------------------------
def _lin(key, fan_in, fan_out):
    kw, kb = jax.random.split(key)
    w = jax.random.normal(kw, (fan_in, fan_out), jnp.float32) * 0.2
    b = jax.random.normal(kb, (1, fan_out), jnp.float32) * 0.05
    return w, b


def _gat_params(key, in_dim, heads, out_ch, edge_dim):
    hc = heads * out_ch
    k = jax.random.split(key, 4)
    wl, bl = _lin(k[0], in_dim, hc)
    wr, br = _lin(k[1], in_dim, hc)
    we = jax.random.normal(k[2], (edge_dim, hc), jnp.float32) * 0.2
    att = jax.random.normal(k[3], (1, hc), jnp.float32) * 0.2
    bias = jnp.zeros((1, hc), jnp.float32)
    return (wl, bl, wr, br, we, att, bias)


def init_params(key, node_feat_dim, edge_feat_dim, num_nodes):
    k = jax.random.split(key, 5)
    return {
        "conv1": _gat_params(k[0], node_feat_dim, 3, 3, edge_feat_dim),
        "conv2": _gat_params(k[1], 3 * 3, 4, 5, edge_feat_dim),
        "mlp": (*_lin(k[2], 4 * 5 * num_nodes, 100),
                *_lin(k[3], 100, 10),
                *_lin(k[4], 10, 1)),
    }


if __name__ == "__main__":
    node_feat_dim, edge_feat_dim, num_nodes, batch = 4, 3, 8, 2
    key = jax.random.PRNGKey(0)
    k_x, k_e, k_p = jax.random.split(key, 3)

    x = jax.random.normal(k_x, (batch, num_nodes, node_feat_dim), jnp.float32)

    # Bidirectional ring graph (same topology per graph, different edge attrs).
    N = num_nodes
    src = jnp.concatenate([jnp.arange(N), (jnp.arange(N) + 1) % N])
    dst = jnp.concatenate([(jnp.arange(N) + 1) % N, jnp.arange(N)])
    edge_index = jnp.stack([src, dst]).astype(jnp.int32)             # [2, 2N]
    edge_attr = jax.random.normal(k_e, (batch, 2 * N, edge_feat_dim), jnp.float32)

    masks, denses = [], []
    for b in range(batch):
        m, d = densify(edge_index, edge_attr[b], N)
        masks.append(m)
        denses.append(d)
    mask = jnp.stack(masks)            # [B, N, N]
    edge_dense = jnp.stack(denses)     # [B, N, N, E]

    params = init_params(k_p, node_feat_dim, edge_feat_dim, num_nodes)

    out = fs_graph_conv_forward(x, edge_dense, mask, params, num_nodes=num_nodes)
    out = jax.block_until_ready(out)
    assert out.shape == (batch, 1), out.shape
    assert bool(jnp.all(jnp.isfinite(out)))
    print("KERNEL_OK")
</pallas_src>

<mosaic_0001>
module attributes {stable_mosaic.version = 11 : i64} {
  func.func @_fs_graph_conv_kernel(%arg0: i32, %arg1: memref<1x8x4xf32, #tpu.memory_space<vmem>>, %arg2: memref<1x64x4xf32, #tpu.memory_space<vmem>>, %arg3: memref<3x9xf32, #tpu.memory_space<vmem>>, %arg4: memref<3x20xf32, #tpu.memory_space<vmem>>, %arg5: memref<4x9xf32, #tpu.memory_space<vmem>>, %arg6: memref<1x9xf32, #tpu.memory_space<vmem>>, %arg7: memref<4x9xf32, #tpu.memory_space<vmem>>, %arg8: memref<1x9xf32, #tpu.memory_space<vmem>>, %arg9: memref<9x3xf32, #tpu.memory_space<vmem>>, %arg10: memref<3x9xf32, #tpu.memory_space<vmem>>, %arg11: memref<1x9xf32, #tpu.memory_space<vmem>>, %arg12: memref<9x20xf32, #tpu.memory_space<vmem>>, %arg13: memref<1x20xf32, #tpu.memory_space<vmem>>, %arg14: memref<9x20xf32, #tpu.memory_space<vmem>>, %arg15: memref<1x20xf32, #tpu.memory_space<vmem>>, %arg16: memref<20x4xf32, #tpu.memory_space<vmem>>, %arg17: memref<4x20xf32, #tpu.memory_space<vmem>>, %arg18: memref<1x20xf32, #tpu.memory_space<vmem>>, %arg19: memref<20x800xf32, #tpu.memory_space<vmem>>, %arg20: memref<8x800xf32, #tpu.memory_space<vmem>>, %arg21: memref<1x100xf32, #tpu.memory_space<vmem>>, %arg22: memref<100x10xf32, #tpu.memory_space<vmem>>, %arg23: memref<1x10xf32, #tpu.memory_space<vmem>>, %arg24: memref<10x1xf32, #tpu.memory_space<vmem>>, %arg25: memref<1x1xf32, #tpu.memory_space<vmem>>, %arg26: memref<1x1x1xf32, #tpu.memory_space<vmem>>) attributes {dimension_semantics = [#tpu.dimension_semantics<parallel>], iteration_bounds = array<i64: 2>, scalar_prefetch = 0 : i64, scratch_operands = 0 : i64, tpu.core_type = #tpu.core_type<tc>, window_params = [{transform_indices = @transform_0, window_bounds = array<i64: 1, 8, 4>}, {transform_indices = @transform_1, window_bounds = array<i64: 1, 64, 4>}, {pipeline_mode = #tpu.pipeline_mode<synchronous>, transform_indices = @transform_2, window_bounds = array<i64: 3, 9>}, {pipeline_mode = #tpu.pipeline_mode<synchronous>, transform_indices = @transform_3, window_bounds = array<i64: 3, 20>}, {pipeline_mode = #tpu.pipeline_mode<synchronous>, transform_indices = @transform_4, window_bounds = array<i64: 4, 9>}, {pipeline_mode = #tpu.pipeline_mode<synchronous>, transform_indices = @transform_5, window_bounds = array<i64: 1, 9>}, {pipeline_mode = #tpu.pipeline_mode<synchronous>, transform_indices = @transform_6, window_bounds = array<i64: 4, 9>}, {pipeline_mode = #tpu.pipeline_mode<synchronous>, transform_indices = @transform_7, window_bounds = array<i64: 1, 9>}, {pipeline_mode = #tpu.pipeline_mode<synchronous>, transform_indices = @transform_8, window_bounds = array<i64: 9, 3>}, {pipeline_mode = #tpu.pipeline_mode<synchronous>, transform_indices = @transform_9, window_bounds = array<i64: 3, 9>}, {pipeline_mode = #tpu.pipeline_mode<synchronous>, transform_indices = @transform_10, window_bounds = array<i64: 1, 9>}, {pipeline_mode = #tpu.pipeline_mode<synchronous>, transform_indices = @transform_11, window_bounds = array<i64: 9, 20>}, {pipeline_mode = #tpu.pipeline_mode<synchronous>, transform_indices = @transform_12, window_bounds = array<i64: 1, 20>}, {pipeline_mode = #tpu.pipeline_mode<synchronous>, transform_indices = @transform_13, window_bounds = array<i64: 9, 20>}, {pipeline_mode = #tpu.pipeline_mode<synchronous>, transform_indices = @transform_14, window_bounds = array<i64: 1, 20>}, {pipeline_mode = #tpu.pipeline_mode<synchronous>, transform_indices = @transform_15, window_bounds = array<i64: 20, 4>}, {pipeline_mode = #tpu.pipeline_mode<synchronous>, transform_indices = @transform_16, window_bounds = array<i64: 4, 20>}, {pipeline_mode = #tpu.pipeline_mode<synchronous>, transform_indices = @transform_17, window_bounds = array<i64: 1, 20>}, {pipeline_mode = #tpu.pipeline_mode<synchronous>, transform_indices = @transform_18, window_bounds = array<i64: 20, 800>}, {pipeline_mode = #tpu.pipeline_mode<synchronous>, transform_indices = @transform_19, window_bounds = array<i64: 8, 800>}, {pipeline_mode = #tpu.pipeline_mode<synchronous>, transform_indices = @transform_20, window_bounds = array<i64: 1, 100>}, {pipeline_mode = #tpu.pipeline_mode<synchronous>, transform_indices = @transform_21, window_bounds = array<i64: 100, 10>}, {pipeline_mode = #tpu.pipeline_mode<synchronous>, transform_indices = @transform_22, window_bounds = array<i64: 1, 10>}, {pipeline_mode = #tpu.pipeline_mode<synchronous>, transform_indices = @transform_23, window_bounds = array<i64: 10, 1>}, {pipeline_mode = #tpu.pipeline_mode<synchronous>, transform_indices = @transform_24, window_bounds = array<i64: 1, 1>}, {transform_indices = @transform_25, window_bounds = array<i64: 1, 1, 1>}]} {
    %c0 = arith.constant 0 : index
    %c0_0 = arith.constant 0 : index
    %c0_1 = arith.constant 0 : index
    %0 = vector.load %arg1[%c0, %c0_0, %c0_1] : memref<1x8x4xf32, #tpu.memory_space<vmem>>, vector<1x8x4xf32>
    %1 = vector.shape_cast %0 : vector<1x8x4xf32> to vector<8x4xf32>
    %c0_2 = arith.constant 0 : index
    %c0_3 = arith.constant 0 : index
    %c0_4 = arith.constant 0 : index
    %2 = vector.load %arg2[%c0_2, %c0_3, %c0_4] : memref<1x64x4xf32, #tpu.memory_space<vmem>>, vector<1x64x4xf32>
    %3 = vector.shape_cast %2 : vector<1x64x4xf32> to vector<64x4xf32>
    %4 = vector.extract_strided_slice %3 {offsets = [0, 0], sizes = [64, 3], strides = [1, 1]} : vector<64x4xf32> to vector<64x3xf32>
    %5 = vector.extract_strided_slice %3 {offsets = [0, 3], sizes = [64, 1], strides = [1, 1]} : vector<64x4xf32> to vector<64x1xf32>
    %c0_5 = arith.constant 0 : index
    %c0_6 = arith.constant 0 : index
    %6 = vector.load %arg3[%c0_5, %c0_6] : memref<3x9xf32, #tpu.memory_space<vmem>>, vector<3x9xf32>
    %cst = arith.constant dense<0.000000e+00> : vector<64x9xf32>
    %7 = tpu.matmul %4, %6, %cst {dimension_numbers = #tpu.dot_dimension_numbers<[1], [0], [0], [1], [0, 0, 1, 1], [], []>} : vector<64x3xf32>, vector<3x9xf32>, vector<64x9xf32> -> vector<64x9xf32>
    %c0_7 = arith.constant 0 : index
    %c0_8 = arith.constant 0 : index
    %8 = vector.load %arg4[%c0_7, %c0_8] : memref<3x20xf32, #tpu.memory_space<vmem>>, vector<3x20xf32>
    %cst_9 = arith.constant dense<0.000000e+00> : vector<64x20xf32>
    %9 = tpu.matmul %4, %8, %cst_9 {dimension_numbers = #tpu.dot_dimension_numbers<[1], [0], [0], [1], [0, 0, 1, 1], [], []>} : vector<64x3xf32>, vector<3x20xf32>, vector<64x20xf32> -> vector<64x20xf32>
    %c0_10 = arith.constant 0 : index
    %c0_11 = arith.constant 0 : index
    %10 = vector.load %arg5[%c0_10, %c0_11] : memref<4x9xf32, #tpu.memory_space<vmem>>, vector<4x9xf32>
    %c0_12 = arith.constant 0 : index
    %c0_13 = arith.constant 0 : index
    %11 = vector.load %arg6[%c0_12, %c0_13] : memref<1x9xf32, #tpu.memory_space<vmem>>, vector<1x9xf32>
    %c0_14 = arith.constant 0 : index
    %c0_15 = arith.constant 0 : index
    %12 = vector.load %arg7[%c0_14, %c0_15] : memref<4x9xf32, #tpu.memory_space<vmem>>, vector<4x9xf32>
    %c0_16 = arith.constant 0 : index
    %c0_17 = arith.constant 0 : index
    %13 = vector.load %arg8[%c0_16, %c0_17] : memref<1x9xf32, #tpu.memory_space<vmem>>, vector<1x9xf32>
    %c0_18 = arith.constant 0 : index
    %c0_19 = arith.constant 0 : index
    %14 = vector.load %arg9[%c0_18, %c0_19] : memref<9x3xf32, #tpu.memory_space<vmem>>, vector<9x3xf32>
    %c0_20 = arith.constant 0 : index
    %c0_21 = arith.constant 0 : index
    %15 = vector.load %arg10[%c0_20, %c0_21] : memref<3x9xf32, #tpu.memory_space<vmem>>, vector<3x9xf32>
    %c0_22 = arith.constant 0 : index
    %c0_23 = arith.constant 0 : index
    %16 = vector.load %arg11[%c0_22, %c0_23] : memref<1x9xf32, #tpu.memory_space<vmem>>, vector<1x9xf32>
    %cst_24 = arith.constant dense<0.000000e+00> : vector<8x9xf32>
    %17 = tpu.matmul %1, %10, %cst_24 {dimension_numbers = #tpu.dot_dimension_numbers<[1], [0], [0], [1], [0, 0, 1, 1], [], []>} : vector<8x4xf32>, vector<4x9xf32>, vector<8x9xf32> -> vector<8x9xf32>
    %18 = vector.broadcast %11 : vector<1x9xf32> to vector<8x9xf32>
    %19 = arith.addf %17, %18 : vector<8x9xf32>
    %cst_25 = arith.constant dense<0.000000e+00> : vector<8x9xf32>
    %20 = tpu.matmul %1, %12, %cst_25 {dimension_numbers = #tpu.dot_dimension_numbers<[1], [0], [0], [1], [0, 0, 1, 1], [], []>} : vector<8x4xf32>, vector<4x9xf32>, vector<8x9xf32> -> vector<8x9xf32>
    %21 = vector.broadcast %13 : vector<1x9xf32> to vector<8x9xf32>
    %22 = arith.addf %20, %21 : vector<8x9xf32>
    %23 = vector.shape_cast %19 : vector<8x9xf32> to vector<1x8x9xf32>
    %24 = vector.shape_cast %23 : vector<1x8x9xf32> to vector<1x1x8x9xf32>
    %25 = vector.shape_cast %22 : vector<8x9xf32> to vector<1x8x9xf32>
    %26 = vector.shape_cast %25 : vector<1x8x9xf32> to vector<1x8x1x9xf32>
    %27 = vector.broadcast %26 : vector<1x8x1x9xf32> to vector<1x8x8x9xf32>
    %28 = vector.broadcast %24 : vector<1x1x8x9xf32> to vector<1x8x8x9xf32>
    %29 = arith.addf %27, %28 : vector<1x8x8x9xf32>
    %30 = vector.shape_cast %7 : vector<64x9xf32> to vector<1x8x8x9xf32>
    %31 = arith.addf %29, %30 : vector<1x8x8x9xf32>
    %cst_26 = arith.constant 0.000000e+00 : f32
    %32 = vector.broadcast %cst_26 : f32 to vector<1x8x8x9xf32>
    %33 = arith.cmpf ogt, %31, %32 : vector<1x8x8x9xf32>
    %cst_27 = arith.constant 2.000000e-01 : f32
    %34 = vector.broadcast %cst_27 : f32 to vector<1x8x8x9xf32>
    %35 = arith.mulf %34, %31 : vector<1x8x8x9xf32>
    %36 = arith.select %33, %31, %35 : vector<1x8x8x9xi1>, vector<1x8x8x9xf32>
    %37 = vector.shape_cast %36 : vector<1x8x8x9xf32> to vector<64x9xf32>
    %cst_28 = arith.constant dense<0.000000e+00> : vector<64x3xf32>
    %38 = tpu.matmul %37, %14, %cst_28 {dimension_numbers = #tpu.dot_dimension_numbers<[1], [0], [0], [1], [0, 0, 1, 1], [], []>} : vector<64x9xf32>, vector<9x3xf32>, vector<64x3xf32> -> vector<64x3xf32>
    %39 = vector.broadcast %5 : vector<64x1xf32> to vector<64x3xf32>
    %40 = arith.addf %38, %39 : vector<64x3xf32>
    %41 = vector.shape_cast %40 : vector<64x3xf32> to vector<8x8x3xf32>
    %cst_29 = arith.constant dense<0xFF800000> : vector<8x3xf32>
    %42 = vector.multi_reduction <maximumf>, %41, %cst_29 [1] : vector<8x8x3xf32> to vector<8x3xf32>
    %43 = vector.shape_cast %42 : vector<8x3xf32> to vector<8x1x3xf32>
    %44 = vector.broadcast %43 : vector<8x1x3xf32> to vector<8x8x3xf32>
    %45 = arith.subf %41, %44 : vector<8x8x3xf32>
    %46 = math.exp %45 : vector<8x8x3xf32>
    %cst_30 = arith.constant dense<0.000000e+00> : vector<8x3xf32>
    %47 = vector.multi_reduction <add>, %46, %cst_30 [1] : vector<8x8x3xf32> to vector<8x3xf32>
    %48 = vector.shape_cast %47 : vector<8x3xf32> to vector<8x1x3xf32>
    %49 = tpu.reciprocal %48 : vector<8x1x3xf32> -> vector<8x1x3xf32>
    %50 = vector.broadcast %49 : vector<8x1x3xf32> to vector<8x8x3xf32>
    %51 = arith.mulf %46, %50 : vector<8x8x3xf32>
    %52 = vector.shape_cast %51 : vector<8x8x3xf32> to vector<64x3xf32>
    %cst_31 = arith.constant dense<0.000000e+00> : vector<64x9xf32>
    %53 = tpu.matmul %52, %15, %cst_31 {dimension_numbers = #tpu.dot_dimension_numbers<[1], [0], [0], [1], [0, 0, 1, 1], [], []>} : vector<64x3xf32>, vector<3x9xf32>, vector<64x9xf32> -> vector<64x9xf32>
    %54 = vector.shape_cast %53 : vector<64x9xf32> to vector<1x8x8x9xf32>
    %55 = vector.broadcast %24 : vector<1x1x8x9xf32> to vector<1x8x8x9xf32>
    %56 = arith.mulf %54, %55 : vector<1x8x8x9xf32>
    %cst_32 = arith.constant dense<0.000000e+00> : vector<1x8x9xf32>
    %57 = vector.multi_reduction <add>, %56, %cst_32 [2] : vector<1x8x8x9xf32> to vector<1x8x9xf32>
    %58 = vector.shape_cast %57 : vector<1x8x9xf32> to vector<8x9xf32>
    %59 = vector.broadcast %16 : vector<1x9xf32> to vector<8x9xf32>
    %60 = arith.addf %58, %59 : vector<8x9xf32>
    %cst_33 = arith.constant 0.000000e+00 : f32
    %61 = vector.broadcast %cst_33 : f32 to vector<8x9xf32>
    %62 = arith.maximumf %60, %61 : vector<8x9xf32>
    %c0_34 = arith.constant 0 : index
    %c0_35 = arith.constant 0 : index
    %63 = vector.load %arg12[%c0_34, %c0_35] : memref<9x20xf32, #tpu.memory_space<vmem>>, vector<9x20xf32>
    %c0_36 = arith.constant 0 : index
    %c0_37 = arith.constant 0 : index
    %64 = vector.load %arg13[%c0_36, %c0_37] : memref<1x20xf32, #tpu.memory_space<vmem>>, vector<1x20xf32>
    %c0_38 = arith.constant 0 : index
    %c0_39 = arith.constant 0 : index
    %65 = vector.load %arg14[%c0_38, %c0_39] : memref<9x20xf32, #tpu.memory_space<vmem>>, vector<9x20xf32>
    %c0_40 = arith.constant 0 : index
    %c0_41 = arith.constant 0 : index
    %66 = vector.load %arg15[%c0_40, %c0_41] : memref<1x20xf32, #tpu.memory_space<vmem>>, vector<1x20xf32>
    %c0_42 = arith.constant 0 : index
    %c0_43 = arith.constant 0 : index
    %67 = vector.load %arg16[%c0_42, %c0_43] : memref<20x4xf32, #tpu.memory_space<vmem>>, vector<20x4xf32>
    %c0_44 = arith.constant 0 : index
    %c0_45 = arith.constant 0 : index
    %68 = vector.load %arg17[%c0_44, %c0_45] : memref<4x20xf32, #tpu.memory_space<vmem>>, vector<4x20xf32>
    %c0_46 = arith.constant 0 : index
    %c0_47 = arith.constant 0 : index
    %69 = vector.load %arg18[%c0_46, %c0_47] : memref<1x20xf32, #tpu.memory_space<vmem>>, vector<1x20xf32>
    %cst_48 = arith.constant dense<0.000000e+00> : vector<8x20xf32>
    %70 = tpu.matmul %62, %63, %cst_48 {dimension_numbers = #tpu.dot_dimension_numbers<[1], [0], [0], [1], [0, 0, 1, 1], [], []>} : vector<8x9xf32>, vector<9x20xf32>, vector<8x20xf32> -> vector<8x20xf32>
    %71 = vector.broadcast %64 : vector<1x20xf32> to vector<8x20xf32>
    %72 = arith.addf %70, %71 : vector<8x20xf32>
    %cst_49 = arith.constant dense<0.000000e+00> : vector<8x20xf32>
    %73 = tpu.matmul %62, %65, %cst_49 {dimension_numbers = #tpu.dot_dimension_numbers<[1], [0], [0], [1], [0, 0, 1, 1], [], []>} : vector<8x9xf32>, vector<9x20xf32>, vector<8x20xf32> -> vector<8x20xf32>
    %74 = vector.broadcast %66 : vector<1x20xf32> to vector<8x20xf32>
    %75 = arith.addf %73, %74 : vector<8x20xf32>
    %76 = vector.shape_cast %72 : vector<8x20xf32> to vector<1x8x20xf32>
    %77 = vector.shape_cast %76 : vector<1x8x20xf32> to vector<1x1x8x20xf32>
    %78 = vector.shape_cast %75 : vector<8x20xf32> to vector<1x8x20xf32>
    %79 = vector.shape_cast %78 : vector<1x8x20xf32> to vector<1x8x1x20xf32>
    %80 = vector.broadcast %79 : vector<1x8x1x20xf32> to vector<1x8x8x20xf32>
    %81 = vector.broadcast %77 : vector<1x1x8x20xf32> to vector<1x8x8x20xf32>
    %82 = arith.addf %80, %81 : vector<1x8x8x20xf32>
    %83 = vector.shape_cast %9 : vector<64x20xf32> to vector<1x8x8x20xf32>
    %84 = arith.addf %82, %83 : vector<1x8x8x20xf32>
    %cst_50 = arith.constant 0.000000e+00 : f32
    %85 = vector.broadcast %cst_50 : f32 to vector<1x8x8x20xf32>
    %86 = arith.cmpf ogt, %84, %85 : vector<1x8x8x20xf32>
    %cst_51 = arith.constant 2.000000e-01 : f32
    %87 = vector.broadcast %cst_51 : f32 to vector<1x8x8x20xf32>
    %88 = arith.mulf %87, %84 : vector<1x8x8x20xf32>
    %89 = arith.select %86, %84, %88 : vector<1x8x8x20xi1>, vector<1x8x8x20xf32>
    %90 = vector.shape_cast %89 : vector<1x8x8x20xf32> to vector<64x20xf32>
    %cst_52 = arith.constant dense<0.000000e+00> : vector<64x4xf32>
    %91 = tpu.matmul %90, %67, %cst_52 {dimension_numbers = #tpu.dot_dimension_numbers<[1], [0], [0], [1], [0, 0, 1, 1], [], []>} : vector<64x20xf32>, vector<20x4xf32>, vector<64x4xf32> -> vector<64x4xf32>
    %92 = vector.broadcast %5 : vector<64x1xf32> to vector<64x4xf32>
    %93 = arith.addf %91, %92 : vector<64x4xf32>
    %94 = vector.shape_cast %93 : vector<64x4xf32> to vector<8x8x4xf32>
    %cst_53 = arith.constant dense<0xFF800000> : vector<8x4xf32>
    %95 = vector.multi_reduction <maximumf>, %94, %cst_53 [1] : vector<8x8x4xf32> to vector<8x4xf32>
    %96 = vector.shape_cast %95 : vector<8x4xf32> to vector<8x1x4xf32>
    %97 = vector.broadcast %96 : vector<8x1x4xf32> to vector<8x8x4xf32>
    %98 = arith.subf %94, %97 : vector<8x8x4xf32>
    %99 = math.exp %98 : vector<8x8x4xf32>
    %cst_54 = arith.constant dense<0.000000e+00> : vector<8x4xf32>
    %100 = vector.multi_reduction <add>, %99, %cst_54 [1] : vector<8x8x4xf32> to vector<8x4xf32>
    %101 = vector.shape_cast %100 : vector<8x4xf32> to vector<8x1x4xf32>
    %102 = tpu.reciprocal %101 : vector<8x1x4xf32> -> vector<8x1x4xf32>
    %103 = vector.broadcast %102 : vector<8x1x4xf32> to vector<8x8x4xf32>
    %104 = arith.mulf %99, %103 : vector<8x8x4xf32>
    %105 = vector.shape_cast %104 : vector<8x8x4xf32> to vector<64x4xf32>
    %cst_55 = arith.constant dense<0.000000e+00> : vector<64x20xf32>
    %106 = tpu.matmul %105, %68, %cst_55 {dimension_numbers = #tpu.dot_dimension_numbers<[1], [0], [0], [1], [0, 0, 1, 1], [], []>} : vector<64x4xf32>, vector<4x20xf32>, vector<64x20xf32> -> vector<64x20xf32>
    %107 = vector.shape_cast %106 : vector<64x20xf32> to vector<1x8x8x20xf32>
    %108 = vector.broadcast %77 : vector<1x1x8x20xf32> to vector<1x8x8x20xf32>
    %109 = arith.mulf %107, %108 : vector<1x8x8x20xf32>
    %cst_56 = arith.constant dense<0.000000e+00> : vector<1x8x20xf32>
    %110 = vector.multi_reduction <add>, %109, %cst_56 [2] : vector<1x8x8x20xf32> to vector<1x8x20xf32>
    %111 = vector.shape_cast %110 : vector<1x8x20xf32> to vector<8x20xf32>
    %112 = vector.broadcast %69 : vector<1x20xf32> to vector<8x20xf32>
    %113 = arith.addf %111, %112 : vector<8x20xf32>
    %cst_57 = arith.constant 0.000000e+00 : f32
    %114 = vector.broadcast %cst_57 : f32 to vector<8x20xf32>
    %115 = arith.maximumf %113, %114 : vector<8x20xf32>
    %c0_58 = arith.constant 0 : index
    %c0_59 = arith.constant 0 : index
    %116 = vector.load %arg19[%c0_58, %c0_59] : memref<20x800xf32, #tpu.memory_space<vmem>>, vector<20x800xf32>
    %cst_60 = arith.constant dense<0.000000e+00> : vector<8x800xf32>
    %117 = tpu.matmul %115, %116, %cst_60 {dimension_numbers = #tpu.dot_dimension_numbers<[1], [0], [0], [1], [0, 0, 1, 1], [], []>} : vector<8x20xf32>, vector<20x800xf32>, vector<8x800xf32> -> vector<8x800xf32>
    %118 = vector.shape_cast %117 : vector<8x800xf32> to vector<1x8x800xf32>
    %c0_61 = arith.constant 0 : index
    %c0_62 = arith.constant 0 : index
    %119 = vector.load %arg20[%c0_61, %c0_62] : memref<8x800xf32, #tpu.memory_space<vmem>>, vector<8x800xf32>
    %120 = vector.shape_cast %119 : vector<8x800xf32> to vector<1x8x800xf32>
    %121 = arith.mulf %118, %120 : vector<1x8x800xf32>
    %cst_63 = arith.constant dense<0.000000e+00> : vector<1x800xf32>
    %122 = vector.multi_reduction <add>, %121, %cst_63 [1] : vector<1x8x800xf32> to vector<1x800xf32>
    %123 = vector.extract_strided_slice %122 {offsets = [0, 0], sizes = [1, 100], strides = [1, 1]} : vector<1x800xf32> to vector<1x100xf32>
    %124 = vector.extract_strided_slice %122 {offsets = [0, 100], sizes = [1, 100], strides = [1, 1]} : vector<1x800xf32> to vector<1x100xf32>
    %125 = arith.addf %123, %124 : vector<1x100xf32>
    %126 = vector.extract_strided_slice %122 {offsets = [0, 200], sizes = [1, 100], strides = [1, 1]} : vector<1x800xf32> to vector<1x100xf32>
    %127 = arith.addf %125, %126 : vector<1x100xf32>
    %128 = vector.extract_strided_slice %122 {offsets = [0, 300], sizes = [1, 100], strides = [1, 1]} : vector<1x800xf32> to vector<1x100xf32>
    %129 = arith.addf %127, %128 : vector<1x100xf32>
    %130 = vector.extract_strided_slice %122 {offsets = [0, 400], sizes = [1, 100], strides = [1, 1]} : vector<1x800xf32> to vector<1x100xf32>
    %131 = arith.addf %129, %130 : vector<1x100xf32>
    %132 = vector.extract_strided_slice %122 {offsets = [0, 500], sizes = [1, 100], strides = [1, 1]} : vector<1x800xf32> to vector<1x100xf32>
    %133 = arith.addf %131, %132 : vector<1x100xf32>
    %134 = vector.extract_strided_slice %122 {offsets = [0, 600], sizes = [1, 100], strides = [1, 1]} : vector<1x800xf32> to vector<1x100xf32>
    %135 = arith.addf %133, %134 : vector<1x100xf32>
    %136 = vector.extract_strided_slice %122 {offsets = [0, 700], sizes = [1, 100], strides = [1, 1]} : vector<1x800xf32> to vector<1x100xf32>
    %137 = arith.addf %135, %136 : vector<1x100xf32>
    %c0_64 = arith.constant 0 : index
    %c0_65 = arith.constant 0 : index
    %138 = vector.load %arg21[%c0_64, %c0_65] : memref<1x100xf32, #tpu.memory_space<vmem>>, vector<1x100xf32>
    %139 = arith.addf %137, %138 : vector<1x100xf32>
    %cst_66 = arith.constant 0.000000e+00 : f32
    %140 = vector.broadcast %cst_66 : f32 to vector<1x100xf32>
    %141 = arith.maximumf %139, %140 : vector<1x100xf32>
    %c0_67 = arith.constant 0 : index
    %c0_68 = arith.constant 0 : index
    %142 = vector.load %arg22[%c0_67, %c0_68] : memref<100x10xf32, #tpu.memory_space<vmem>>, vector<100x10xf32>
    %cst_69 = arith.constant dense<0.000000e+00> : vector<1x10xf32>
    %143 = tpu.matmul %141, %142, %cst_69 {dimension_numbers = #tpu.dot_dimension_numbers<[1], [0], [0], [1], [0, 0, 1, 1], [], []>} : vector<1x100xf32>, vector<100x10xf32>, vector<1x10xf32> -> vector<1x10xf32>
    %c0_70 = arith.constant 0 : index
    %c0_71 = arith.constant 0 : index
    %144 = vector.load %arg23[%c0_70, %c0_71] : memref<1x10xf32, #tpu.memory_space<vmem>>, vector<1x10xf32>
    %145 = arith.addf %143, %144 : vector<1x10xf32>
    %cst_72 = arith.constant 0.000000e+00 : f32
    %146 = vector.broadcast %cst_72 : f32 to vector<1x10xf32>
    %147 = arith.maximumf %145, %146 : vector<1x10xf32>
    %c0_73 = arith.constant 0 : index
    %c0_74 = arith.constant 0 : index
    %148 = vector.load %arg24[%c0_73, %c0_74] : memref<10x1xf32, #tpu.memory_space<vmem>>, vector<10x1xf32>
    %cst_75 = arith.constant dense<0.000000e+00> : vector<1x1xf32>
    %149 = tpu.matmul %147, %148, %cst_75 {dimension_numbers = #tpu.dot_dimension_numbers<[1], [0], [0], [1], [0, 0, 1, 1], [], []>} : vector<1x10xf32>, vector<10x1xf32>, vector<1x1xf32> -> vector<1x1xf32>
    %c0_76 = arith.constant 0 : index
    %c0_77 = arith.constant 0 : index
    %150 = vector.load %arg25[%c0_76, %c0_77] : memref<1x1xf32, #tpu.memory_space<vmem>>, vector<1x1xf32>
    %151 = arith.addf %149, %150 : vector<1x1xf32>
    %c0_78 = arith.constant 0 : index
    %c0_79 = arith.constant 0 : index
    %c0_80 = arith.constant 0 : index
    %152 = vector.load %arg26[%c0_78, %c0_79, %c0_80] : memref<1x1x1xf32, #tpu.memory_space<vmem>>, vector<1x1x1xf32>
    %153 = vector.shape_cast %152 : vector<1x1x1xf32> to vector<1x1xf32>
    %154 = vector.shape_cast %151 : vector<1x1xf32> to vector<1x1x1xf32>
    tpu.vector_store %arg26[%c0_78, %c0_79, %c0_80], %154 {strides = array<i32>} : memref<1x1x1xf32, #tpu.memory_space<vmem>>, vector<1x1x1xf32>,
    return
  }
  func.func @transform_0(%arg0: i32) -> (i32, i32, i32) {
    %c0_i32 = arith.constant 0 : i32
    %c0_i32_0 = arith.constant 0 : i32
    %c0_i32_1 = arith.constant 0 : i32
    return %arg0, %c0_i32, %c0_i32_0 : i32, i32, i32
  }
  func.func @transform_1(%arg0: i32) -> (i32, i32, i32) {
    %c0_i32 = arith.constant 0 : i32
    %c0_i32_0 = arith.constant 0 : i32
    %c0_i32_1 = arith.constant 0 : i32
    return %arg0, %c0_i32, %c0_i32_0 : i32, i32, i32
  }
  func.func @transform_2(%arg0: i32) -> (i32, i32) {
    %c0_i32 = arith.constant 0 : i32
    %c0_i32_0 = arith.constant 0 : i32
    %c0_i32_1 = arith.constant 0 : i32
    return %c0_i32, %c0_i32_0 : i32, i32
  }
  func.func @transform_3(%arg0: i32) -> (i32, i32) {
    %c0_i32 = arith.constant 0 : i32
    %c0_i32_0 = arith.constant 0 : i32
    %c0_i32_1 = arith.constant 0 : i32
    return %c0_i32, %c0_i32_0 : i32, i32
  }
  func.func @transform_4(%arg0: i32) -> (i32, i32) {
    %c0_i32 = arith.constant 0 : i32
    %c0_i32_0 = arith.constant 0 : i32
    %c0_i32_1 = arith.constant 0 : i32
    return %c0_i32, %c0_i32_0 : i32, i32
  }
  func.func @transform_5(%arg0: i32) -> (i32, i32) {
    %c0_i32 = arith.constant 0 : i32
    %c0_i32_0 = arith.constant 0 : i32
    %c0_i32_1 = arith.constant 0 : i32
    return %c0_i32, %c0_i32_0 : i32, i32
  }
  func.func @transform_6(%arg0: i32) -> (i32, i32) {
    %c0_i32 = arith.constant 0 : i32
    %c0_i32_0 = arith.constant 0 : i32
    %c0_i32_1 = arith.constant 0 : i32
    return %c0_i32, %c0_i32_0 : i32, i32
  }
  func.func @transform_7(%arg0: i32) -> (i32, i32) {
    %c0_i32 = arith.constant 0 : i32
    %c0_i32_0 = arith.constant 0 : i32
    %c0_i32_1 = arith.constant 0 : i32
    return %c0_i32, %c0_i32_0 : i32, i32
  }
  func.func @transform_8(%arg0: i32) -> (i32, i32) {
    %c0_i32 = arith.constant 0 : i32
    %c0_i32_0 = arith.constant 0 : i32
    %c0_i32_1 = arith.constant 0 : i32
    return %c0_i32, %c0_i32_0 : i32, i32
  }
  func.func @transform_9(%arg0: i32) -> (i32, i32) {
    %c0_i32 = arith.constant 0 : i32
    %c0_i32_0 = arith.constant 0 : i32
    %c0_i32_1 = arith.constant 0 : i32
    return %c0_i32, %c0_i32_0 : i32, i32
  }
  func.func @transform_10(%arg0: i32) -> (i32, i32) {
    %c0_i32 = arith.constant 0 : i32
    %c0_i32_0 = arith.constant 0 : i32
    %c0_i32_1 = arith.constant 0 : i32
    return %c0_i32, %c0_i32_0 : i32, i32
  }
  func.func @transform_11(%arg0: i32) -> (i32, i32) {
    %c0_i32 = arith.constant 0 : i32
    %c0_i32_0 = arith.constant 0 : i32
    %c0_i32_1 = arith.constant 0 : i32
    return %c0_i32, %c0_i32_0 : i32, i32
  }
  func.func @transform_12(%arg0: i32) -> (i32, i32) {
    %c0_i32 = arith.constant 0 : i32
    %c0_i32_0 = arith.constant 0 : i32
    %c0_i32_1 = arith.constant 0 : i32
    return %c0_i32, %c0_i32_0 : i32, i32
  }
  func.func @transform_13(%arg0: i32) -> (i32, i32) {
    %c0_i32 = arith.constant 0 : i32
    %c0_i32_0 = arith.constant 0 : i32
    %c0_i32_1 = arith.constant 0 : i32
    return %c0_i32, %c0_i32_0 : i32, i32
  }
  func.func @transform_14(%arg0: i32) -> (i32, i32) {
    %c0_i32 = arith.constant 0 : i32
    %c0_i32_0 = arith.constant 0 : i32
    %c0_i32_1 = arith.constant 0 : i32
    return %c0_i32, %c0_i32_0 : i32, i32
  }
  func.func @transform_15(%arg0: i32) -> (i32, i32) {
    %c0_i32 = arith.constant 0 : i32
    %c0_i32_0 = arith.constant 0 : i32
    %c0_i32_1 = arith.constant 0 : i32
    return %c0_i32, %c0_i32_0 : i32, i32
  }
  func.func @transform_16(%arg0: i32) -> (i32, i32) {
    %c0_i32 = arith.constant 0 : i32
    %c0_i32_0 = arith.constant 0 : i32
    %c0_i32_1 = arith.constant 0 : i32
    return %c0_i32, %c0_i32_0 : i32, i32
  }
  func.func @transform_17(%arg0: i32) -> (i32, i32) {
    %c0_i32 = arith.constant 0 : i32
    %c0_i32_0 = arith.constant 0 : i32
    %c0_i32_1 = arith.constant 0 : i32
    return %c0_i32, %c0_i32_0 : i32, i32
  }
  func.func @transform_18(%arg0: i32) -> (i32, i32) {
    %c0_i32 = arith.constant 0 : i32
    %c0_i32_0 = arith.constant 0 : i32
    %c0_i32_1 = arith.constant 0 : i32
    return %c0_i32, %c0_i32_0 : i32, i32
  }
  func.func @transform_19(%arg0: i32) -> (i32, i32) {
    %c0_i32 = arith.constant 0 : i32
    %c0_i32_0 = arith.constant 0 : i32
    %c0_i32_1 = arith.constant 0 : i32
    return %c0_i32, %c0_i32_0 : i32, i32
  }
  func.func @transform_20(%arg0: i32) -> (i32, i32) {
    %c0_i32 = arith.constant 0 : i32
    %c0_i32_0 = arith.constant 0 : i32
    %c0_i32_1 = arith.constant 0 : i32
    return %c0_i32, %c0_i32_0 : i32, i32
  }
  func.func @transform_21(%arg0: i32) -> (i32, i32) {
    %c0_i32 = arith.constant 0 : i32
    %c0_i32_0 = arith.constant 0 : i32
    %c0_i32_1 = arith.constant 0 : i32
    return %c0_i32, %c0_i32_0 : i32, i32
  }
  func.func @transform_22(%arg0: i32) -> (i32, i32) {
    %c0_i32 = arith.constant 0 : i32
    %c0_i32_0 = arith.constant 0 : i32
    %c0_i32_1 = arith.constant 0 : i32
    return %c0_i32, %c0_i32_0 : i32, i32
  }
  func.func @transform_23(%arg0: i32) -> (i32, i32) {
    %c0_i32 = arith.constant 0 : i32
    %c0_i32_0 = arith.constant 0 : i32
    %c0_i32_1 = arith.constant 0 : i32
    return %c0_i32, %c0_i32_0 : i32, i32
  }
  func.func @transform_24(%arg0: i32) -> (i32, i32) {
    %c0_i32 = arith.constant 0 : i32
    %c0_i32_0 = arith.constant 0 : i32
    %c0_i32_1 = arith.constant 0 : i32
    return %c0_i32, %c0_i32_0 : i32, i32
  }
  func.func @transform_25(%arg0: i32) -> (i32, i32, i32) {
    %c0_i32 = arith.constant 0 : i32
    %c0_i32_0 = arith.constant 0 : i32
    %c0_i32_1 = arith.constant 0 : i32
    return %arg0, %c0_i32, %c0_i32_0 : i32, i32, i32
  }
}

</mosaic_0001>

<llo_original>
// kernel: tpu_custom_call.1
$region0: #{tpu_custom_call.1}
  #allocation0 [shape = 'u32[]', space=smem, size = 0x4, offset = 0x4, fixed_abs, tag = 'smem constant byte address 0x4 - core index']
  #allocation1 [shape = 'u32[72,128]{1,0:T(1,128)}', space=vmem, size = 0x9000, scoped, tag = 'internal scratch']
  #allocation2 [shape = 'f32[1,1]{1,0:T(1,128)S(1)}', space=vmem, size = 0x200, scoped, tag = 'scoped memory for tpu_custom_call.1']
  %s0 = inlined_call_operand.vmem [shape: f32[2,8,4], index: 0, kind: input, shape index: {}]
  %s1 = inlined_call_operand.vmem [shape: f32[2,64,4], index: 1, kind: input, shape index: {}]
  %s2 = inlined_call_operand.vmem [shape: f32[3,9], index: 2, kind: input, shape index: {}]
  %s3 = inlined_call_operand.vmem [shape: f32[3,20], index: 3, kind: input, shape index: {}]
  %s4 = inlined_call_operand.vmem [shape: f32[4,9], index: 4, kind: input, shape index: {}]
  %s5 = inlined_call_operand.vmem [shape: f32[1,9], index: 5, kind: input, shape index: {}]
  %s6 = inlined_call_operand.vmem [shape: f32[4,9], index: 6, kind: input, shape index: {}]
  %s7 = inlined_call_operand.vmem [shape: f32[1,9], index: 7, kind: input, shape index: {}]
  %s8 = inlined_call_operand.vmem [shape: f32[9,3], index: 8, kind: input, shape index: {}]
  %s9 = inlined_call_operand.vmem [shape: f32[3,9], index: 9, kind: input, shape index: {}]
  %s10 = inlined_call_operand.vmem [shape: f32[1,9], index: 10, kind: input, shape index: {}]
  %s11 = inlined_call_operand.vmem [shape: f32[9,20], index: 11, kind: input, shape index: {}]
  %s12 = inlined_call_operand.vmem [shape: f32[1,20], index: 12, kind: input, shape index: {}]
  %s13 = inlined_call_operand.vmem [shape: f32[9,20], index: 13, kind: input, shape index: {}]
  %s14 = inlined_call_operand.vmem [shape: f32[1,20], index: 14, kind: input, shape index: {}]
  %s15 = inlined_call_operand.vmem [shape: f32[20,4], index: 15, kind: input, shape index: {}]
  %s16 = inlined_call_operand.vmem [shape: f32[4,20], index: 16, kind: input, shape index: {}]
  %s17 = inlined_call_operand.vmem [shape: f32[1,20], index: 17, kind: input, shape index: {}]
  %s18 = inlined_call_operand.vmem [shape: f32[20,800], index: 18, kind: input, shape index: {}]
  %s19 = inlined_call_operand.vmem [shape: f32[8,800], index: 19, kind: input, shape index: {}]
  %s20 = inlined_call_operand.vmem [shape: f32[1,100], index: 20, kind: input, shape index: {}]
  %s21 = inlined_call_operand.vmem [shape: f32[100,10], index: 21, kind: input, shape index: {}]
  %s22 = inlined_call_operand.vmem [shape: f32[1,10], index: 22, kind: input, shape index: {}]
  %s23 = inlined_call_operand.vmem [shape: f32[10,1], index: 23, kind: input, shape index: {}]
  %s24 = inlined_call_operand.<no memory space> [shape: f32[1,1], index: 24, kind: input, shape index: {}]
  %s25 = inlined_call_operand.vmem [shape: f32[2,1,1], index: 25, kind: output, shape index: {}]
  %s26 = sld [smem:[#allocation0]]
  $region133: #{tpu_custom_call.1} parent=0
    _
  %s28 = ssub.s32 1, %s26
  %s29 = scalar_select 0, %s28, %s26
  %v30 = vstv %s24
  %31 = vst [vmem:[#allocation2] sm:$0x1] %v30
  loop: start=0, step=1, limit=4
  $region2: #{tpu_custom_call.1} parent=0 // loop_pre_header
    _
  $region3: #{tpu_custom_call.1} parent=0 // loop_header
    %s33 = sphi 0, %s37
    %p34 = scmp.ge.s32.totalorder %s33, 4
    %s43 = sphi 0, %s45
    %s46 = sphi 0, %s43
    %s47 = sphi 0, %s46
    %s63 = sphi 0, %s47
    %s69 = sphi 0, %s71
    %s72 = sphi 0, %s69
    %s73 = sphi 0, %s72
    %s89 = sphi 0, %s73
    %s93 = sphi 0, %s93
    %s95 = sphi 0, %s93
    %s96 = sphi 0, %s95
    %s110 = sphi 0, %s96
    %s114 = sphi 0, %s114
    %s116 = sphi 0, %s114
    %s117 = sphi 0, %s116
    %s131 = sphi 0, %s117
    %s135 = sphi 0, %s135
    %s137 = sphi 0, %s135
    %s138 = sphi 0, %s137
    %s152 = sphi 0, %s138
    %s156 = sphi 0, %s156
    %s158 = sphi 0, %s156
    %s159 = sphi 0, %s158
    %s173 = sphi 0, %s159
    %s177 = sphi 0, %s177
    %s179 = sphi 0, %s177
    %s180 = sphi 0, %s179
    %s194 = sphi 0, %s180
    %s198 = sphi 0, %s198
    %s200 = sphi 0, %s198
    %s201 = sphi 0, %s200
    %s215 = sphi 0, %s201
    %s219 = sphi 0, %s219
    %s221 = sphi 0, %s219
    %s222 = sphi 0, %s221
    %s236 = sphi 0, %s222
    %s240 = sphi 0, %s240
    %s242 = sphi 0, %s240
    %s243 = sphi 0, %s242
    %s257 = sphi 0, %s243
    %s261 = sphi 0, %s261
    %s263 = sphi 0, %s261
    %s264 = sphi 0, %s263
    %s278 = sphi 0, %s264
    %s282 = sphi 0, %s282
    %s284 = sphi 0, %s282
    %s285 = sphi 0, %s284
    %s299 = sphi 0, %s285
    %s303 = sphi 0, %s303
    %s305 = sphi 0, %s303
    %s306 = sphi 0, %s305
    %s320 = sphi 0, %s306
    %s324 = sphi 0, %s324
    %s326 = sphi 0, %s324
    %s327 = sphi 0, %s326
    %s341 = sphi 0, %s327
    %s345 = sphi 0, %s345
    %s347 = sphi 0, %s345
    %s348 = sphi 0, %s347
    %s362 = sphi 0, %s348
    %s366 = sphi 0, %s366
    %s368 = sphi 0, %s366
    %s369 = sphi 0, %s368
    %s383 = sphi 0, %s369
    %s387 = sphi 0, %s387
    %s389 = sphi 0, %s387
    %s390 = sphi 0, %s389
    %s404 = sphi 0, %s390
    %s408 = sphi 0, %s408
    %s410 = sphi 0, %s408
    %s411 = sphi 0, %s410
    %s425 = sphi 0, %s411
    %s429 = sphi 0, %s429
    %s431 = sphi 0, %s429
    %s432 = sphi 0, %s431
    %s446 = sphi 0, %s432
    %s450 = sphi 0, %s450
    %s452 = sphi 0, %s450
    %s453 = sphi 0, %s452
    %s467 = sphi 0, %s453
    %s471 = sphi 0, %s471
    %s473 = sphi 0, %s471
    %s474 = sphi 0, %s473
    %s488 = sphi 0, %s474
    %s492 = sphi 0, %s492
    %s494 = sphi 0, %s492
    %s495 = sphi 0, %s494
    %s509 = sphi 0, %s495
    %s513 = sphi 0, %s513
    %s515 = sphi 0, %s513
    %s516 = sphi 0, %s515
    %s530 = sphi 0, %s516
    %s534 = sphi 0, %s534
    %s536 = sphi 0, %s534
    %s537 = sphi 0, %s536
    %s551 = sphi 0, %s537
    %s555 = sphi 0, %s555
    %s557 = sphi 0, %s555
    %s558 = sphi 0, %s557
    %s572 = sphi 0, %s558
    %s578 = sphi 0, %s580
    %s581 = sphi 0, %s578
    %s582 = sphi 0, %s581
    %s598 = sphi 0, %s582
  $region4: #{tpu_custom_call.1} parent=0 // loop_header_branch
    %36 = sbr.rel (%p34) target = $region8
  $region5: #{tpu_custom_call.1} parent=0 // loop_body
    %s38 = ssub.s32 %s33, 1
    %s39 = ssub.s32 %s33, 2
    %s40 = sadd.s32 %s33, 1
    %s41 = ssub.s32 %s33, %s40
    %p42 = scmp.eq.s32.totalorder %s41, 0
    %s44 = sadd.s32 %s43, 1
    %s45 = scalar_select %p42, %s43, %s44
    %p48 = pneg %p42
    %p49 = scmp.eq.s32.totalorder %s33, 1
    %p50 = por %p48, %p49
    %p51 = scmp.ne.s32.totalorder %s43, %s46
    %p52 = scmp.eq.s32.totalorder %s33, 0
    %p53 = por %p51, %p52
    %p54 = scmp.ne.s32.totalorder %s43, %s46
    %p55 = scmp.eq.s32.totalorder %s38, 1
    %p56 = por %p54, %p55
    %p57 = scmp.ne.s32.totalorder %s46, %s47
    %p58 = scmp.eq.s32.totalorder %s38, 0
    %p59 = por %p57, %p58
    %p60 = scmp.ne.s32.totalorder %s46, %s47
    %p61 = scmp.eq.s32.totalorder %s39, 1
    %p62 = por %p60, %p61
    %p64 = scmp.ne.s32.totalorder %s47, %s63
    %p65 = scmp.eq.s32.totalorder %s39, 0
    %p66 = por %p64, %p65
    %s67 = ssub.s32 %s33, %s40
    %p68 = scmp.eq.s32.totalorder %s67, 0
    %s70 = sadd.s32 %s69, 1
    %s71 = scalar_select %p68, %s69, %s70
    %p74 = pneg %p68
    %p75 = scmp.eq.s32.totalorder %s33, 1
    %p76 = por %p74, %p75
    %p77 = scmp.ne.s32.totalorder %s69, %s72
    %p78 = scmp.eq.s32.totalorder %s33, 0
    %p79 = por %p77, %p78
    %p80 = scmp.ne.s32.totalorder %s69, %s72
    %p81 = scmp.eq.s32.totalorder %s38, 1
    %p82 = por %p80, %p81
    %p83 = scmp.ne.s32.totalorder %s72, %s73
    %p84 = scmp.eq.s32.totalorder %s38, 0
    %p85 = por %p83, %p84
    %p86 = scmp.ne.s32.totalorder %s72, %s73
    %p87 = scmp.eq.s32.totalorder %s39, 1
    %p88 = por %p86, %p87
    %p90 = scmp.ne.s32.totalorder %s73, %s89
    %p91 = scmp.eq.s32.totalorder %s39, 0
    %p92 = por %p90, %p91
    %s94 = sadd.s32 %s93, 1
    %p97 = scmp.eq.s32.totalorder %s33, 1
    %p98 = scmp.ne.s32.totalorder %s93, %s95
    %p99 = scmp.eq.s32.totalorder %s33, 0
    %p100 = por %p98, %p99
    %p101 = scmp.ne.s32.totalorder %s93, %s95
    %p102 = scmp.eq.s32.totalorder %s38, 1
    %p103 = por %p101, %p102
    %p104 = scmp.ne.s32.totalorder %s95, %s96
    %p105 = scmp.eq.s32.totalorder %s38, 0
    %p106 = por %p104, %p105
    %p107 = scmp.ne.s32.totalorder %s95, %s96
    %p108 = scmp.eq.s32.totalorder %s39, 1
    %p109 = por %p107, %p108
    %p111 = scmp.ne.s32.totalorder %s96, %s110
    %p112 = scmp.eq.s32.totalorder %s39, 0
    %p113 = por %p111, %p112
    %s115 = sadd.s32 %s114, 1
    %p118 = scmp.eq.s32.totalorder %s33, 1
    %p119 = scmp.ne.s32.totalorder %s114, %s116
    %p120 = scmp.eq.s32.totalorder %s33, 0
    %p121 = por %p119, %p120
    %p122 = scmp.ne.s32.totalorder %s114, %s116
    %p123 = scmp.eq.s32.totalorder %s38, 1
    %p124 = por %p122, %p123
    %p125 = scmp.ne.s32.totalorder %s116, %s117
    %p126 = scmp.eq.s32.totalorder %s38, 0
    %p127 = por %p125, %p126
    %p128 = scmp.ne.s32.totalorder %s116, %s117
    %p129 = scmp.eq.s32.totalorder %s39, 1
    %p130 = por %p128, %p129
    %p132 = scmp.ne.s32.totalorder %s117, %s131
    %p133 = scmp.eq.s32.totalorder %s39, 0
    %p134 = por %p132, %p133
    %s136 = sadd.s32 %s135, 1
    %p139 = scmp.eq.s32.totalorder %s33, 1
    %p140 = scmp.ne.s32.totalorder %s135, %s137
    %p141 = scmp.eq.s32.totalorder %s33, 0
    %p142 = por %p140, %p141
    %p143 = scmp.ne.s32.totalorder %s135, %s137
    %p144 = scmp.eq.s32.totalorder %s38, 1
    %p145 = por %p143, %p144
    %p146 = scmp.ne.s32.totalorder %s137, %s138
    %p147 = scmp.eq.s32.totalorder %s38, 0
    %p148 = por %p146, %p147
    %p149 = scmp.ne.s32.totalorder %s137, %s138
    %p150 = scmp.eq.s32.totalorder %s39, 1
    %p151 = por %p149, %p150
    %p153 = scmp.ne.s32.totalorder %s138, %s152
    %p154 = scmp.eq.s32.totalorder %s39, 0
    %p155 = por %p153, %p154
    %s157 = sadd.s32 %s156, 1
    %p160 = scmp.eq.s32.totalorder %s33, 1
    %p161 = scmp.ne.s32.totalorder %s156, %s158
    %p162 = scmp.eq.s32.totalorder %s33, 0
    %p163 = por %p161, %p162
    %p164 = scmp.ne.s32.totalorder %s156, %s158
    %p165 = scmp.eq.s32.totalorder %s38, 1
    %p166 = por %p164, %p165
    %p167 = scmp.ne.s32.totalorder %s158, %s159
    %p168 = scmp.eq.s32.totalorder %s38, 0
    %p169 = por %p167, %p168
    %p170 = scmp.ne.s32.totalorder %s158, %s159
    %p171 = scmp.eq.s32.totalorder %s39, 1
    %p172 = por %p170, %p171
    %p174 = scmp.ne.s32.totalorder %s159, %s173
    %p175 = scmp.eq.s32.totalorder %s39, 0
    %p176 = por %p174, %p175
    %s178 = sadd.s32 %s177, 1
    %p181 = scmp.eq.s32.totalorder %s33, 1
    %p182 = scmp.ne.s32.totalorder %s177, %s179
    %p183 = scmp.eq.s32.totalorder %s33, 0
    %p184 = por %p182, %p183
    %p185 = scmp.ne.s32.totalorder %s177, %s179
    %p186 = scmp.eq.s32.totalorder %s38, 1
    %p187 = por %p185, %p186
    %p188 = scmp.ne.s32.totalorder %s179, %s180
    %p189 = scmp.eq.s32.totalorder %s38, 0
    %p190 = por %p188, %p189
    %p191 = scmp.ne.s32.totalorder %s179, %s180
    %p192 = scmp.eq.s32.totalorder %s39, 1
    %p193 = por %p191, %p192
    %p195 = scmp.ne.s32.totalorder %s180, %s194
    %p196 = scmp.eq.s32.totalorder %s39, 0
    %p197 = por %p195, %p196
    %s199 = sadd.s32 %s198, 1
    %p202 = scmp.eq.s32.totalorder %s33, 1
    %p203 = scmp.ne.s32.totalorder %s198, %s200
    %p204 = scmp.eq.s32.totalorder %s33, 0
    %p205 = por %p203, %p204
    %p206 = scmp.ne.s32.totalorder %s198, %s200
    %p207 = scmp.eq.s32.totalorder %s38, 1
    %p208 = por %p206, %p207
    %p209 = scmp.ne.s32.totalorder %s200, %s201
    %p210 = scmp.eq.s32.totalorder %s38, 0
    %p211 = por %p209, %p210
    %p212 = scmp.ne.s32.totalorder %s200, %s201
    %p213 = scmp.eq.s32.totalorder %s39, 1
    %p214 = por %p212, %p213
    %p216 = scmp.ne.s32.totalorder %s201, %s215
    %p217 = scmp.eq.s32.totalorder %s39, 0
    %p218 = por %p216, %p217
    %s220 = sadd.s32 %s219, 1
    %p223 = scmp.eq.s32.totalorder %s33, 1
    %p224 = scmp.ne.s32.totalorder %s219, %s221
    %p225 = scmp.eq.s32.totalorder %s33, 0
    %p226 = por %p224, %p225
    %p227 = scmp.ne.s32.totalorder %s219, %s221
    %p228 = scmp.eq.s32.totalorder %s38, 1
    %p229 = por %p227, %p228
    %p230 = scmp.ne.s32.totalorder %s221, %s222
    %p231 = scmp.eq.s32.totalorder %s38, 0
    %p232 = por %p230, %p231
    %p233 = scmp.ne.s32.totalorder %s221, %s222
    %p234 = scmp.eq.s32.totalorder %s39, 1
    %p235 = por %p233, %p234
    %p237 = scmp.ne.s32.totalorder %s222, %s236
    %p238 = scmp.eq.s32.totalorder %s39, 0
    %p239 = por %p237, %p238
    %s241 = sadd.s32 %s240, 1
    %p244 = scmp.eq.s32.totalorder %s33, 1
    %p245 = scmp.ne.s32.totalorder %s240, %s242
    %p246 = scmp.eq.s32.totalorder %s33, 0
    %p247 = por %p245, %p246
    %p248 = scmp.ne.s32.totalorder %s240, %s242
    %p249 = scmp.eq.s32.totalorder %s38, 1
    %p250 = por %p248, %p249
    %p251 = scmp.ne.s32.totalorder %s242, %s243
    %p252 = scmp.eq.s32.totalorder %s38, 0
    %p253 = por %p251, %p252
    %p254 = scmp.ne.s32.totalorder %s242, %s243
    %p255 = scmp.eq.s32.totalorder %s39, 1
    %p256 = por %p254, %p255
    %p258 = scmp.ne.s32.totalorder %s243, %s257
    %p259 = scmp.eq.s32.totalorder %s39, 0
    %p260 = por %p258, %p259
    %s262 = sadd.s32 %s261, 1
    %p265 = scmp.eq.s32.totalorder %s33, 1
    %p266 = scmp.ne.s32.totalorder %s261, %s263
    %p267 = scmp.eq.s32.totalorder %s33, 0
    %p268 = por %p266, %p267
    %p269 = scmp.ne.s32.totalorder %s261, %s263
    %p270 = scmp.eq.s32.totalorder %s38, 1
    %p271 = por %p269, %p270
    %p272 = scmp.ne.s32.totalorder %s263, %s264
    %p273 = scmp.eq.s32.totalorder %s38, 0
    %p274 = por %p272, %p273
    %p275 = scmp.ne.s32.totalorder %s263, %s264
    %p276 = scmp.eq.s32.totalorder %s39, 1
    %p277 = por %p275, %p276
    %p279 = scmp.ne.s32.totalorder %s264, %s278
    %p280 = scmp.eq.s32.totalorder %s39, 0
    %p281 = por %p279, %p280
    %s283 = sadd.s32 %s282, 1
    %p286 = scmp.eq.s32.totalorder %s33, 1
    %p287 = scmp.ne.s32.totalorder %s282, %s284
    %p288 = scmp.eq.s32.totalorder %s33, 0
    %p289 = por %p287, %p288
    %p290 = scmp.ne.s32.totalorder %s282, %s284
    %p291 = scmp.eq.s32.totalorder %s38, 1
    %p292 = por %p290, %p291
    %p293 = scmp.ne.s32.totalorder %s284, %s285
    %p294 = scmp.eq.s32.totalorder %s38, 0
    %p295 = por %p293, %p294
    %p296 = scmp.ne.s32.totalorder %s284, %s285
    %p297 = scmp.eq.s32.totalorder %s39, 1
    %p298 = por %p296, %p297
    %p300 = scmp.ne.s32.totalorder %s285, %s299
    %p301 = scmp.eq.s32.totalorder %s39, 0
    %p302 = por %p300, %p301
    %s304 = sadd.s32 %s303, 1
    %p307 = scmp.eq.s32.totalorder %s33, 1
    %p308 = scmp.ne.s32.totalorder %s303, %s305
    %p309 = scmp.eq.s32.totalorder %s33, 0
    %p310 = por %p308, %p309
    %p311 = scmp.ne.s32.totalorder %s303, %s305
    %p312 = scmp.eq.s32.totalorder %s38, 1
    %p313 = por %p311, %p312
    %p314 = scmp.ne.s32.totalorder %s305, %s306
    %p315 = scmp.eq.s32.totalorder %s38, 0
    %p316 = por %p314, %p315
    %p317 = scmp.ne.s32.totalorder %s305, %s306
    %p318 = scmp.eq.s32.totalorder %s39, 1
    %p319 = por %p317, %p318
    %p321 = scmp.ne.s32.totalorder %s306, %s320
    %p322 = scmp.eq.s32.totalorder %s39, 0
    %p323 = por %p321, %p322
    %s325 = sadd.s32 %s324, 1
    %p328 = scmp.eq.s32.totalorder %s33, 1
    %p329 = scmp.ne.s32.totalorder %s324, %s326
    %p330 = scmp.eq.s32.totalorder %s33, 0
    %p331 = por %p329, %p330
    %p332 = scmp.ne.s32.totalorder %s324, %s326
    %p333 = scmp.eq.s32.totalorder %s38, 1
    %p334 = por %p332, %p333
    %p335 = scmp.ne.s32.totalorder %s326, %s327
    %p336 = scmp.eq.s32.totalorder %s38, 0
    %p337 = por %p335, %p336
    %p338 = scmp.ne.s32.totalorder %s326, %s327
    %p339 = scmp.eq.s32.totalorder %s39, 1
    %p340 = por %p338, %p339
    %p342 = scmp.ne.s32.totalorder %s327, %s341
    %p343 = scmp.eq.s32.totalorder %s39, 0
    %p344 = por %p342, %p343
    %s346 = sadd.s32 %s345, 1
    %p349 = scmp.eq.s32.totalorder %s33, 1
    %p350 = scmp.ne.s32.totalorder %s345, %s347
    %p351 = scmp.eq.s32.totalorder %s33, 0
    %p352 = por %p350, %p351
    %p353 = scmp.ne.s32.totalorder %s345, %s347
    %p354 = scmp.eq.s32.totalorder %s38, 1
    %p355 = por %p353, %p354
    %p356 = scmp.ne.s32.totalorder %s347, %s348
    %p357 = scmp.eq.s32.totalorder %s38, 0
    %p358 = por %p356, %p357
    %p359 = scmp.ne.s32.totalorder %s347, %s348
    %p360 = scmp.eq.s32.totalorder %s39, 1
    %p361 = por %p359, %p360
    %p363 = scmp.ne.s32.totalorder %s348, %s362
    %p364 = scmp.eq.s32.totalorder %s39, 0
    %p365 = por %p363, %p364
    %s367 = sadd.s32 %s366, 1
    %p370 = scmp.eq.s32.totalorder %s33, 1
    %p371 = scmp.ne.s32.totalorder %s366, %s368
    %p372 = scmp.eq.s32.totalorder %s33, 0
    %p373 = por %p371, %p372
    %p374 = scmp.ne.s32.totalorder %s366, %s368
    %p375 = scmp.eq.s32.totalorder %s38, 1
    %p376 = por %p374, %p375
    %p377 = scmp.ne.s32.totalorder %s368, %s369
    %p378 = scmp.eq.s32.totalorder %s38, 0
    %p379 = por %p377, %p378
    %p380 = scmp.ne.s32.totalorder %s368, %s369
    %p381 = scmp.eq.s32.totalorder %s39, 1
    %p382 = por %p380, %p381
    %p384 = scmp.ne.s32.totalorder %s369, %s383
    %p385 = scmp.eq.s32.totalorder %s39, 0
    %p386 = por %p384, %p385
    %s388 = sadd.s32 %s387, 1
    %p391 = scmp.eq.s32.totalorder %s33, 1
    %p392 = scmp.ne.s32.totalorder %s387, %s389
    %p393 = scmp.eq.s32.totalorder %s33, 0
    %p394 = por %p392, %p393
    %p395 = scmp.ne.s32.totalorder %s387, %s389
    %p396 = scmp.eq.s32.totalorder %s38, 1
    %p397 = por %p395, %p396
    %p398 = scmp.ne.s32.totalorder %s389, %s390
    %p399 = scmp.eq.s32.totalorder %s38, 0
    %p400 = por %p398, %p399
    %p401 = scmp.ne.s32.totalorder %s389, %s390
    %p402 = scmp.eq.s32.totalorder %s39, 1
    %p403 = por %p401, %p402
    %p405 = scmp.ne.s32.totalorder %s390, %s404
    %p406 = scmp.eq.s32.totalorder %s39, 0
    %p407 = por %p405, %p406
    %s409 = sadd.s32 %s408, 1
    %p412 = scmp.eq.s32.totalorder %s33, 1
    %p413 = scmp.ne.s32.totalorder %s408, %s410
    %p414 = scmp.eq.s32.totalorder %s33, 0
    %p415 = por %p413, %p414
    %p416 = scmp.ne.s32.totalorder %s408, %s410
    %p417 = scmp.eq.s32.totalorder %s38, 1
    %p418 = por %p416, %p417
    %p419 = scmp.ne.s32.totalorder %s410, %s411
    %p420 = scmp.eq.s32.totalorder %s38, 0
    %p421 = por %p419, %p420
    %p422 = scmp.ne.s32.totalorder %s410, %s411
    %p423 = scmp.eq.s32.totalorder %s39, 1
    %p424 = por %p422, %p423
    %p426 = scmp.ne.s32.totalorder %s411, %s425
    %p427 = scmp.eq.s32.totalorder %s39, 0
    %p428 = por %p426, %p427
    %s430 = sadd.s32 %s429, 1
    %p433 = scmp.eq.s32.totalorder %s33, 1
    %p434 = scmp.ne.s32.totalorder %s429, %s431
    %p435 = scmp.eq.s32.totalorder %s33, 0
    %p436 = por %p434, %p435
    %p437 = scmp.ne.s32.totalorder %s429, %s431
    %p438 = scmp.eq.s32.totalorder %s38, 1
    %p439 = por %p437, %p438
    %p440 = scmp.ne.s32.totalorder %s431, %s432
    %p441 = scmp.eq.s32.totalorder %s38, 0
    %p442 = por %p440, %p441
    %p443 = scmp.ne.s32.totalorder %s431, %s432
    %p444 = scmp.eq.s32.totalorder %s39, 1
    %p445 = por %p443, %p444
    %p447 = scmp.ne.s32.totalorder %s432, %s446
    %p448 = scmp.eq.s32.totalorder %s39, 0
    %p449 = por %p447, %p448
    %s451 = sadd.s32 %s450, 1
    %p454 = scmp.eq.s32.totalorder %s33, 1
    %p455 = scmp.ne.s32.totalorder %s450, %s452
    %p456 = scmp.eq.s32.totalorder %s33, 0
    %p457 = por %p455, %p456
    %p458 = scmp.ne.s32.totalorder %s450, %s452
    %p459 = scmp.eq.s32.totalorder %s38, 1
    %p460 = por %p458, %p459
    %p461 = scmp.ne.s32.totalorder %s452, %s453
    %p462 = scmp.eq.s32.totalorder %s38, 0
    %p463 = por %p461, %p462
    %p464 = scmp.ne.s32.totalorder %s452, %s453
    %p465 = scmp.eq.s32.totalorder %s39, 1
    %p466 = por %p464, %p465
    %p468 = scmp.ne.s32.totalorder %s453, %s467
    %p469 = scmp.eq.s32.totalorder %s39, 0
    %p470 = por %p468, %p469
    %s472 = sadd.s32 %s471, 1
    %p475 = scmp.eq.s32.totalorder %s33, 1
    %p476 = scmp.ne.s32.totalorder %s471, %s473
    %p477 = scmp.eq.s32.totalorder %s33, 0
    %p478 = por %p476, %p477
    %p479 = scmp.ne.s32.totalorder %s471, %s473
    %p480 = scmp.eq.s32.totalorder %s38, 1
    %p481 = por %p479, %p480
    %p482 = scmp.ne.s32.totalorder %s473, %s474
    %p483 = scmp.eq.s32.totalorder %s38, 0
    %p484 = por %p482, %p483
    %p485 = scmp.ne.s32.totalorder %s473, %s474
    %p486 = scmp.eq.s32.totalorder %s39, 1
    %p487 = por %p485, %p486
    %p489 = scmp.ne.s32.totalorder %s474, %s488
    %p490 = scmp.eq.s32.totalorder %s39, 0
    %p491 = por %p489, %p490
    %s493 = sadd.s32 %s492, 1
    %p496 = scmp.eq.s32.totalorder %s33, 1
    %p497 = scmp.ne.s32.totalorder %s492, %s494
    %p498 = scmp.eq.s32.totalorder %s33, 0
    %p499 = por %p497, %p498
    %p500 = scmp.ne.s32.totalorder %s492, %s494
    %p501 = scmp.eq.s32.totalorder %s38, 1
    %p502 = por %p500, %p501
    %p503 = scmp.ne.s32.totalorder %s494, %s495
    %p504 = scmp.eq.s32.totalorder %s38, 0
    %p505 = por %p503, %p504
    %p506 = scmp.ne.s32.totalorder %s494, %s495
    %p507 = scmp.eq.s32.totalorder %s39, 1
    %p508 = por %p506, %p507
    %p510 = scmp.ne.s32.totalorder %s495, %s509
    %p511 = scmp.eq.s32.totalorder %s39, 0
    %p512 = por %p510, %p511
    %s514 = sadd.s32 %s513, 1
    %p517 = scmp.eq.s32.totalorder %s33, 1
    %p518 = scmp.ne.s32.totalorder %s513, %s515
    %p519 = scmp.eq.s32.totalorder %s33, 0
    %p520 = por %p518, %p519
    %p521 = scmp.ne.s32.totalorder %s513, %s515
    %p522 = scmp.eq.s32.totalorder %s38, 1
    %p523 = por %p521, %p522
    %p524 = scmp.ne.s32.totalorder %s515, %s516
    %p525 = scmp.eq.s32.totalorder %s38, 0
    %p526 = por %p524, %p525
    %p527 = scmp.ne.s32.totalorder %s515, %s516
    %p528 = scmp.eq.s32.totalorder %s39, 1
    %p529 = por %p527, %p528
    %p531 = scmp.ne.s32.totalorder %s516, %s530
    %p532 = scmp.eq.s32.totalorder %s39, 0
    %p533 = por %p531, %p532
    %s535 = sadd.s32 %s534, 1
    %p538 = scmp.eq.s32.totalorder %s33, 1
    %p539 = scmp.ne.s32.totalorder %s534, %s536
    %p540 = scmp.eq.s32.totalorder %s33, 0
    %p541 = por %p539, %p540
    %p542 = scmp.ne.s32.totalorder %s534, %s536
    %p543 = scmp.eq.s32.totalorder %s38, 1
    %p544 = por %p542, %p543
    %p545 = scmp.ne.s32.totalorder %s536, %s537
    %p546 = scmp.eq.s32.totalorder %s38, 0
    %p547 = por %p545, %p546
    %p548 = scmp.ne.s32.totalorder %s536, %s537
    %p549 = scmp.eq.s32.totalorder %s39, 1
    %p550 = por %p548, %p549
    %p552 = scmp.ne.s32.totalorder %s537, %s551
    %p553 = scmp.eq.s32.totalorder %s39, 0
    %p554 = por %p552, %p553
    %s556 = sadd.s32 %s555, 1
    %p559 = scmp.eq.s32.totalorder %s33, 1
    %p560 = scmp.ne.s32.totalorder %s555, %s557
    %p561 = scmp.eq.s32.totalorder %s33, 0
    %p562 = por %p560, %p561
    %p563 = scmp.ne.s32.totalorder %s555, %s557
    %p564 = scmp.eq.s32.totalorder %s38, 1
    %p565 = por %p563, %p564
    %p566 = scmp.ne.s32.totalorder %s557, %s558
    %p567 = scmp.eq.s32.totalorder %s38, 0
    %p568 = por %p566, %p567
    %p569 = scmp.ne.s32.totalorder %s557, %s558
    %p570 = scmp.eq.s32.totalorder %s39, 1
    %p571 = por %p569, %p570
    %p573 = scmp.ne.s32.totalorder %s558, %s572
    %p574 = scmp.eq.s32.totalorder %s39, 0
    %p575 = por %p573, %p574
    %s576 = ssub.s32 %s33, %s40
    %p577 = scmp.eq.s32.totalorder %s576, 0
    %s579 = sadd.s32 %s578, 1
    %s580 = scalar_select %p577, %s578, %s579
    %p583 = pneg %p577
    %p584 = scmp.eq.s32.totalorder %s33, 1
    %p585 = por %p583, %p584
    %p586 = scmp.ne.s32.totalorder %s578, %s581
    %p587 = scmp.eq.s32.totalorder %s33, 0
    %p588 = por %p586, %p587
    %p589 = scmp.ne.s32.totalorder %s578, %s581
    %p590 = scmp.eq.s32.totalorder %s38, 1
    %p591 = por %p589, %p590
    %p592 = scmp.ne.s32.totalorder %s581, %s582
    %p593 = scmp.eq.s32.totalorder %s38, 0
    %p594 = por %p592, %p593
    %p595 = scmp.ne.s32.totalorder %s581, %s582
    %p596 = scmp.eq.s32.totalorder %s39, 1
    %p597 = por %p595, %p596
    %p599 = scmp.ne.s32.totalorder %s582, %s598
    %p600 = scmp.eq.s32.totalorder %s39, 0
    %p601 = por %p599, %p600
    %p602 = scmp.le.s32.totalorder 1, %s33
    %p603 = scmp.lt.s32.totalorder %s33, 3
    %p604 = pnand %p602, %p603
    %p605 = pneg %p604
    // Predicated region
    $region9: #{tpu_custom_call.1} parent=5 // pred_check
      _
    $region10: #{tpu_custom_call.1} parent=5 // pred_check_branch
      %607 = sbr.rel (%p604) target = $region12
    $region11: #{tpu_custom_call.1} parent=5 // pred_region
      %s608 = ssub.s32 %s33, 1
      // Predicated region
      $region13: #{tpu_custom_call.1} parent=11 // pred_check
        %p609 = pneg %p106
      $region14: #{tpu_custom_call.1} parent=11 // pred_check_branch
        %611 = sbr.rel (%p609) target = $region16
      $region15: #{tpu_custom_call.1} parent=11 // pred_region
        _
      $region16: #{tpu_custom_call.1} parent=11 // pred_fallthru
        _
      // Predicated region
      $region17: #{tpu_custom_call.1} parent=11 // pred_check
        %p612 = pneg %p127
      $region18: #{tpu_custom_call.1} parent=11 // pred_check_branch
        %614 = sbr.rel (%p612) target = $region20
      $region19: #{tpu_custom_call.1} parent=11 // pred_region
        _
      $region20: #{tpu_custom_call.1} parent=11 // pred_fallthru
        _
      // Predicated region
      $region21: #{tpu_custom_call.1} parent=11 // pred_check
        %p615 = pneg %p148
      $region22: #{tpu_custom_call.1} parent=11 // pred_check_branch
        %617 = sbr.rel (%p615) target = $region24
      $region23: #{tpu_custom_call.1} parent=11 // pred_region
        _
      $region24: #{tpu_custom_call.1} parent=11 // pred_fallthru
        _
      // Predicated region
      $region25: #{tpu_custom_call.1} parent=11 // pred_check
        %p618 = pneg %p169
      $region26: #{tpu_custom_call.1} parent=11 // pred_check_branch
        %620 = sbr.rel (%p618) target = $region28
      $region27: #{tpu_custom_call.1} parent=11 // pred_region
        _
      $region28: #{tpu_custom_call.1} parent=11 // pred_fallthru
        _
      // Predicated region
      $region29: #{tpu_custom_call.1} parent=11 // pred_check
        %p621 = pneg %p190
      $region30: #{tpu_custom_call.1} parent=11 // pred_check_branch
        %623 = sbr.rel (%p621) target = $region32
      $region31: #{tpu_custom_call.1} parent=11 // pred_region
        _
      $region32: #{tpu_custom_call.1} parent=11 // pred_fallthru
        _
      // Predicated region
      $region33: #{tpu_custom_call.1} parent=11 // pred_check
        %p624 = pneg %p211
      $region34: #{tpu_custom_call.1} parent=11 // pred_check_branch
        %626 = sbr.rel (%p624) target = $region36
      $region35: #{tpu_custom_call.1} parent=11 // pred_region
        _
      $region36: #{tpu_custom_call.1} parent=11 // pred_fallthru
        _
      // Predicated region
      $region37: #{tpu_custom_call.1} parent=11 // pred_check
        %p627 = pneg %p232
      $region38: #{tpu_custom_call.1} parent=11 // pred_check_branch
        %629 = sbr.rel (%p627) target = $region40
      $region39: #{tpu_custom_call.1} parent=11 // pred_region
        _
      $region40: #{tpu_custom_call.1} parent=11 // pred_fallthru
        _
      // Predicated region
      $region41: #{tpu_custom_call.1} parent=11 // pred_check
        %p630 = pneg %p253
      $region42: #{tpu_custom_call.1} parent=11 // pred_check_branch
        %632 = sbr.rel (%p630) target = $region44
      $region43: #{tpu_custom_call.1} parent=11 // pred_region
        _
      $region44: #{tpu_custom_call.1} parent=11 // pred_fallthru
        _
      // Predicated region
      $region45: #{tpu_custom_call.1} parent=11 // pred_check
        %p633 = pneg %p274
      $region46: #{tpu_custom_call.1} parent=11 // pred_check_branch
        %635 = sbr.rel (%p633) target = $region48
      $region47: #{tpu_custom_call.1} parent=11 // pred_region
        _
      $region48: #{tpu_custom_call.1} parent=11 // pred_fallthru
        _
      // Predicated region
      $region49: #{tpu_custom_call.1} parent=11 // pred_check
        %p636 = pneg %p295
      $region50: #{tpu_custom_call.1} parent=11 // pred_check_branch
        %638 = sbr.rel (%p636) target = $region52
      $region51: #{tpu_custom_call.1} parent=11 // pred_region
        _
      $region52: #{tpu_custom_call.1} parent=11 // pred_fallthru
        _
      // Predicated region
      $region53: #{tpu_custom_call.1} parent=11 // pred_check
        %p639 = pneg %p316
      $region54: #{tpu_custom_call.1} parent=11 // pred_check_branch
        %641 = sbr.rel (%p639) target = $region56
      $region55: #{tpu_custom_call.1} parent=11 // pred_region
        _
      $region56: #{tpu_custom_call.1} parent=11 // pred_fallthru
        _
      // Predicated region
      $region57: #{tpu_custom_call.1} parent=11 // pred_check
        %p642 = pneg %p337
      $region58: #{tpu_custom_call.1} parent=11 // pred_check_branch
        %644 = sbr.rel (%p642) target = $region60
      $region59: #{tpu_custom_call.1} parent=11 // pred_region
        _
      $region60: #{tpu_custom_call.1} parent=11 // pred_fallthru
        _
      // Predicated region
      $region61: #{tpu_custom_call.1} parent=11 // pred_check
        %p645 = pneg %p358
      $region62: #{tpu_custom_call.1} parent=11 // pred_check_branch
        %647 = sbr.rel (%p645) target = $region64
      $region63: #{tpu_custom_call.1} parent=11 // pred_region
        _
      $region64: #{tpu_custom_call.1} parent=11 // pred_fallthru
        _
      // Predicated region
      $region65: #{tpu_custom_call.1} parent=11 // pred_check
        %p648 = pneg %p379
      $region66: #{tpu_custom_call.1} parent=11 // pred_check_branch
        %650 = sbr.rel (%p648) target = $region68
      $region67: #{tpu_custom_call.1} parent=11 // pred_region
        _
      $region68: #{tpu_custom_call.1} parent=11 // pred_fallthru
        _
      // Predicated region
      $region69: #{tpu_custom_call.1} parent=11 // pred_check
        %p651 = pneg %p400
      $region70: #{tpu_custom_call.1} parent=11 // pred_check_branch
        %653 = sbr.rel (%p651) target = $region72
      $region71: #{tpu_custom_call.1} parent=11 // pred_region
        _
      $region72: #{tpu_custom_call.1} parent=11 // pred_fallthru
        _
      // Predicated region
      $region73: #{tpu_custom_call.1} parent=11 // pred_check
        %p654 = pneg %p421
      $region74: #{tpu_custom_call.1} parent=11 // pred_check_branch
        %656 = sbr.rel (%p654) target = $region76
      $region75: #{tpu_custom_call.1} parent=11 // pred_region
        _
      $region76: #{tpu_custom_call.1} parent=11 // pred_fallthru
        _
      // Predicated region
      $region77: #{tpu_custom_call.1} parent=11 // pred_check
        %p657 = pneg %p442
      $region78: #{tpu_custom_call.1} parent=11 // pred_check_branch
        %659 = sbr.rel (%p657) target = $region80
      $region79: #{tpu_custom_call.1} parent=11 // pred_region
        _
      $region80: #{tpu_custom_call.1} parent=11 // pred_fallthru
        _
      // Predicated region
      $region81: #{tpu_custom_call.1} parent=11 // pred_check
        %p660 = pneg %p463
      $region82: #{tpu_custom_call.1} parent=11 // pred_check_branch
        %662 = sbr.rel (%p660) target = $region84
      $region83: #{tpu_custom_call.1} parent=11 // pred_region
        _
      $region84: #{tpu_custom_call.1} parent=11 // pred_fallthru
        _
      // Predicated region
      $region85: #{tpu_custom_call.1} parent=11 // pred_check
        %p663 = pneg %p484
      $region86: #{tpu_custom_call.1} parent=11 // pred_check_branch
        %665 = sbr.rel (%p663) target = $region88
      $region87: #{tpu_custom_call.1} parent=11 // pred_region
        _
      $region88: #{tpu_custom_call.1} parent=11 // pred_fallthru
        _
      // Predicated region
      $region89: #{tpu_custom_call.1} parent=11 // pred_check
        %p666 = pneg %p505
      $region90: #{tpu_custom_call.1} parent=11 // pred_check_branch
        %668 = sbr.rel (%p666) target = $region92
      $region91: #{tpu_custom_call.1} parent=11 // pred_region
        _
      $region92: #{tpu_custom_call.1} parent=11 // pred_fallthru
        _
      // Predicated region
      $region93: #{tpu_custom_call.1} parent=11 // pred_check
        %p669 = pneg %p526
      $region94: #{tpu_custom_call.1} parent=11 // pred_check_branch
        %671 = sbr.rel (%p669) target = $region96
      $region95: #{tpu_custom_call.1} parent=11 // pred_region
        _
      $region96: #{tpu_custom_call.1} parent=11 // pred_fallthru
        _
      // Predicated region
      $region97: #{tpu_custom_call.1} parent=11 // pred_check
        %p672 = pneg %p547
      $region98: #{tpu_custom_call.1} parent=11 // pred_check_branch
        %674 = sbr.rel (%p672) target = $region100
      $region99: #{tpu_custom_call.1} parent=11 // pred_region
        _
      $region100: #{tpu_custom_call.1} parent=11 // pred_fallthru
        _
      // Predicated region
      $region101: #{tpu_custom_call.1} parent=11 // pred_check
        %p675 = pneg %p568
      $region102: #{tpu_custom_call.1} parent=11 // pred_check_branch
        %677 = sbr.rel (%p675) target = $region104
      $region103: #{tpu_custom_call.1} parent=11 // pred_region
        _
      $region104: #{tpu_custom_call.1} parent=11 // pred_fallthru
        _
    $region12: #{tpu_custom_call.1} parent=5 // pred_fallthru
      _
    %p678 = scmp.lt.s32.totalorder %s33, 2
    // Predicated region
    $region105: #{tpu_custom_call.1} parent=5 // pred_check
      %p679 = pneg %p678
    $region106: #{tpu_custom_call.1} parent=5 // pred_check_branch
      %681 = sbr.rel (%p679) target = $region108
    $region107: #{tpu_custom_call.1} parent=5 // pred_region
      // Predicated region
      $region109: #{tpu_custom_call.1} parent=107 // pred_check
        %p682 = pneg %p53
      $region110: #{tpu_custom_call.1} parent=107 // pred_check_branch
        %684 = sbr.rel (%p682) target = $region112
      $region111: #{tpu_custom_call.1} parent=107 // pred_region
        %p685 = scmp.lt.s32.totalorder %s33, 1
        %s686 = scalar_select %p685, %s33, 1
        %s687 = smul.addr %s686, 8
        %s688 = scalar_lea.vmem %s0, %s687
      $region112: #{tpu_custom_call.1} parent=107 // pred_fallthru
        _
      // Predicated region
      $region113: #{tpu_custom_call.1} parent=107 // pred_check
        %p689 = pneg %p79
      $region114: #{tpu_custom_call.1} parent=107 // pred_check_branch
        %691 = sbr.rel (%p689) target = $region116
      $region115: #{tpu_custom_call.1} parent=107 // pred_region
        %p692 = scmp.lt.s32.totalorder %s33, 1
        %s693 = scalar_select %p692, %s33, 1
        %s694 = smul.addr %s693, 8
        %s695 = smul.addr %s694, 8
        %s696 = scalar_lea.vmem %s1, %s695
      $region116: #{tpu_custom_call.1} parent=107 // pred_fallthru
        _
    $region108: #{tpu_custom_call.1} parent=5 // pred_fallthru
      _
    %p697 = scmp.le.s32.totalorder 1, %s33
    %p698 = scmp.lt.s32.totalorder %s33, 3
    %p699 = pnand %p697, %p698
    %p700 = pneg %p699
    // Predicated region
    $region117: #{tpu_custom_call.1} parent=5 // pred_check
      _
    $region118: #{tpu_custom_call.1} parent=5 // pred_check_branch
      %702 = sbr.rel (%p699) target = $region120
    $region119: #{tpu_custom_call.1} parent=5 // pred_region
      %s703 = ssub.s32 %s33, 1
      %p704 = scmp.lt.s32.totalorder %s38, 1
      %s705 = scalar_select %p704, %s38, 1
      %s706 = smul.addr %s705, 8
      %s707 = scalar_lea.vmem %s0, %s706
      %p708 = pneg %p59
      %p709 = pneg %p56
      %p710 = scmp.lt.s32.totalorder %s38, 1
      %s711 = scalar_select %p710, %s38, 1
      %s712 = smul.addr %s711, 8
      %s713 = smul.addr %s712, 8
      %s714 = scalar_lea.vmem %s1, %s713
      %p715 = pneg %p85
      %p716 = pneg %p82
      %p717 = pneg %p106
      %p718 = pneg %p103
      %p719 = pneg %p127
      %p720 = pneg %p124
      %p721 = pneg %p148
      %p722 = pneg %p145
      %p723 = pneg %p169
      %p724 = pneg %p166
      %p725 = pneg %p190
      %p726 = pneg %p187
      %p727 = pneg %p211
      %p728 = pneg %p208
      %p729 = pneg %p232
      %p730 = pneg %p229
      %p731 = pneg %p253
      %p732 = pneg %p250
      %p733 = pneg %p274
      %p734 = pneg %p271
      %p735 = pneg %p295
      %p736 = pneg %p292
      %p737 = pneg %p316
      %p738 = pneg %p313
      %p739 = pneg %p337
      %p740 = pneg %p334
      %p741 = pneg %p358
      %p742 = pneg %p355
      %p743 = pneg %p379
      %p744 = pneg %p376
      %p745 = pneg %p400
      %p746 = pneg %p397
      %p747 = pneg %p421
      %p748 = pneg %p418
      %p749 = pneg %p442
      %p750 = pneg %p439
      %p751 = pneg %p463
      %p752 = pneg %p460
      %p753 = pneg %p484
      %p754 = pneg %p481
      %p755 = pneg %p505
      %p756 = pneg %p502
      %p757 = pneg %p526
      %p758 = pneg %p523
      %p759 = pneg %p547
      %p760 = pneg %p544
      %p761 = pneg %p568
      %p762 = pneg %p565
      %p763 = pneg %p594
      %p764 = pneg %p591
      %p765 = scmp.lt.s32.totalorder %s38, 1
      %s766 = scalar_select %p765, %s38, 1
      %s767 = scalar_lea.vmem %s25, %s766
      %p768 = scmp.lt.s32.totalorder %s38, 1
      %s769 = scalar_select %p768, %s38, 1
      %s770 = smul.addr %s769, 8
      %s771 = scalar_lea.vmem %s0, %s770
      %p772 = scmp.lt.s32.totalorder %s38, 1
      %s773 = scalar_select %p772, %s38, 1
      %s774 = smul.addr %s773, 8
      %s775 = smul.addr %s774, 8
      %s776 = scalar_lea.vmem %s1, %s775
      %p777 = scmp.lt.s32.totalorder %s38, 1
      %s778 = scalar_select %p777, %s38, 1
      %s779 = scalar_lea.vmem %s25, %s778
      %v780 = vld [vmem:[%s771] sm:$0xff]
      %v781 = vld [vmem:[%s776] sm:$0xff]
      %v782 = vld [vmem:[%s776 + $0x8] sm:$0xff]
      %v783 = vld [vmem:[%s776 + $0x10] sm:$0xff]
      %v784 = vld [vmem:[%s776 + $0x18] sm:$0xff]
      %v785 = vld [vmem:[%s776 + $0x20] sm:$0xff]
      %v786 = vld [vmem:[%s776 + $0x28] sm:$0xff]
      %v787 = vld [vmem:[%s776 + $0x30] sm:$0xff]
      %v788 = vld [vmem:[%s776 + $0x38] sm:$0xff]
      %v789 = vld [vmem:[%s2] sm:$0x7]
      %vm790 = vcmask 23552
      %v792 = vsel %vm790, %v781, 0
      %v795 = vsel %vm790, %v782, 0
      %v798 = vsel %vm790, %v783, 0
      %v801 = vsel %vm790, %v784, 0
      %v804 = vsel %vm790, %v785, 0
      %v807 = vsel %vm790, %v786, 0
      %v810 = vsel %vm790, %v787, 0
      %v813 = vsel %vm790, %v788, 0
      %vm815 = vcmask 1042432
      %v817 = vsel %vm815, %v789, 0
      %819 = vmatpush.msra.mxu0 0.0
      %820 = vmatpush.msra.mxu0 0.0
      %821 = vmatpush.msra.mxu0 0.0
      %822 = vmatpush.msra.mxu0 0.0
      %823 = vmatpush.msra.mxu0 0.0
      %824 = vmatpush.msra.mxu0 0.0
      %825 = vmatpush.msra.mxu0 0.0
      %826 = vmatpush.msra.mxu0 0.0
      %827 = vmatpush.msra.mxu0 0.0
      %828 = vmatpush.msra.mxu0 0.0
      %829 = vmatpush.msra.mxu0 0.0
      %830 = vmatpush.msra.mxu0 0.0
      %831 = vmatpush.msra.mxu0 0.0
      %832 = vmatpush.msra.mxu0 0.0
      %833 = vmatpush.msra.mxu0 0.0
      %834 = vmatpush.msra.mxu0 %v817
      %835 = vmatmul.f32.gmra.mxu0 %v792
      %v836 = vpop.f32.mrf.mxu0
      %v837 = vadd.f32 0.0, %v836
      %838 = vmatmul.f32.gmra.mxu0 %v795
      %v839 = vpop.f32.mrf.mxu0
      %v840 = vadd.f32 0.0, %v839
      %841 = vmatmul.f32.gmra.mxu0 %v798
      %v842 = vpop.f32.mrf.mxu0
      %v843 = vadd.f32 0.0, %v842
      %844 = vmatmul.f32.gmra.mxu0 %v801
      %v845 = vpop.f32.mrf.mxu0
      %v846 = vadd.f32 0.0, %v845
      %847 = vmatmul.f32.gmra.mxu0 %v804
      %v848 = vpop.f32.mrf.mxu0
      %v849 = vadd.f32 0.0, %v848
      %850 = vmatmul.f32.gmra.mxu0 %v807
      %v851 = vpop.f32.mrf.mxu0
      %v852 = vadd.f32 0.0, %v851
      %853 = vmatmul.f32.gmra.mxu0 %v810
      %v854 = vpop.f32.mrf.mxu0
      %v855 = vadd.f32 0.0, %v854
      %856 = vmatmul.f32.gmra.mxu0 %v813
      %v857 = vpop.f32.mrf.mxu0
      %v858 = vadd.f32 0.0, %v857
      %859 = vdwg.mxu0
      %v860 = vld [vmem:[%s3] sm:$0x7]
      %v862 = vsel %vm815, %v860, 0
      %864 = vmatpush.msra.mxu0 0.0
      %865 = vmatpush.msra.mxu0 0.0
      %866 = vmatpush.msra.mxu0 0.0
      %867 = vmatpush.msra.mxu0 0.0
      %868 = vmatpush.msra.mxu0 0.0
      %869 = vmatpush.msra.mxu0 0.0
      %870 = vmatpush.msra.mxu0 0.0
      %871 = vmatpush.msra.mxu0 0.0
      %872 = vmatpush.msra.mxu0 0.0
      %873 = vmatpush.msra.mxu0 0.0
      %874 = vmatpush.msra.mxu0 0.0
      %875 = vmatpush.msra.mxu0 0.0
      %876 = vmatpush.msra.mxu0 0.0
      %877 = vmatpush.msra.mxu0 0.0
      %878 = vmatpush.msra.mxu0 0.0
      %879 = vmatpush.msra.mxu0 %v862
      %880 = vmatmul.f32.gmra.mxu0 %v792
      %v881 = vpop.f32.mrf.mxu0
      %v882 = vadd.f32 0.0, %v881
      %883 = vmatmul.f32.gmra.mxu0 %v795
      %v884 = vpop.f32.mrf.mxu0
      %v885 = vadd.f32 0.0, %v884
      %886 = vmatmul.f32.gmra.mxu0 %v798
      %v887 = vpop.f32.mrf.mxu0
      %v888 = vadd.f32 0.0, %v887
      %889 = vmatmul.f32.gmra.mxu0 %v801
      %v890 = vpop.f32.mrf.mxu0
      %v891 = vadd.f32 0.0, %v890
      %892 = vmatmul.f32.gmra.mxu0 %v804
      %v893 = vpop.f32.mrf.mxu0
      %v894 = vadd.f32 0.0, %v893
      %895 = vmatmul.f32.gmra.mxu0 %v807
      %v896 = vpop.f32.mrf.mxu0
      %v897 = vadd.f32 0.0, %v896
      %898 = vmatmul.f32.gmra.mxu0 %v810
      %v899 = vpop.f32.mrf.mxu0
      %v900 = vadd.f32 0.0, %v899
      %901 = vmatmul.f32.gmra.mxu0 %v813
      %v902 = vpop.f32.mrf.mxu0
      %v903 = vadd.f32 0.0, %v902
      %904 = vdwg.mxu0
      %v905 = vld [vmem:[%s4] sm:$0xf]
      %v906 = vld [vmem:[%s5] sm:$0x1]
      %v907 = vld [vmem:[%s6] sm:$0xf]
      %v908 = vld [vmem:[%s7] sm:$0x1]
      %v909 = vld [vmem:[%s8] sm:$0xff]
      %v910 = vld [vmem:[%s8 + $0x8] sm:$0x1]
      %v911 = vld [vmem:[%s9] sm:$0x7]
      %v912 = vld [vmem:[%s10] sm:$0x1]
      %v914 = vperm.slane %v906, 0
      %vm916 = vcmask 31744
      %v918 = vsel %vm916, %v780, 0
      %vm920 = vcmask 1043456
      %v922 = vsel %vm920, %v905, 0
      %924 = vmatpush.msra.mxu0 0.0
      %925 = vmatpush.msra.mxu0 0.0
      %926 = vmatpush.msra.mxu0 0.0
      %927 = vmatpush.msra.mxu0 0.0
      %928 = vmatpush.msra.mxu0 0.0
      %929 = vmatpush.msra.mxu0 0.0
      %930 = vmatpush.msra.mxu0 0.0
      %931 = vmatpush.msra.mxu0 0.0
      %932 = vmatpush.msra.mxu0 0.0
      %933 = vmatpush.msra.mxu0 0.0
      %934 = vmatpush.msra.mxu0 0.0
      %935 = vmatpush.msra.mxu0 0.0
      %936 = vmatpush.msra.mxu0 0.0
      %937 = vmatpush.msra.mxu0 0.0
      %938 = vmatpush.msra.mxu0 0.0
      %939 = vmatpush.msra.mxu0 %v922
      %940 = vmatmul.f32.gmra.mxu0 %v918
      %v941 = vpop.f32.mrf.mxu0
      %v942 = vadd.f32 %v914, %v941
      %943 = vdwg.mxu0
      %v945 = vperm.slane %v908, 0
      %v948 = vsel %vm920, %v907, 0
      %950 = vmatpush.msra.mxu0 0.0
      %951 = vmatpush.msra.mxu0 0.0
      %952 = vmatpush.msra.mxu0 0.0
      %953 = vmatpush.msra.mxu0 0.0
      %954 = vmatpush.msra.mxu0 0.0
      %955 = vmatpush.msra.mxu0 0.0
      %956 = vmatpush.msra.mxu0 0.0
      %957 = vmatpush.msra.mxu0 0.0
      %958 = vmatpush.msra.mxu0 0.0
      %959 = vmatpush.msra.mxu0 0.0
      %960 = vmatpush.msra.mxu0 0.0
      %961 = vmatpush.msra.mxu0 0.0
      %962 = vmatpush.msra.mxu0 0.0
      %963 = vmatpush.msra.mxu0 0.0
      %964 = vmatpush.msra.mxu0 0.0
      %965 = vmatpush.msra.mxu0 %v948
      %966 = vmatmul.f32.gmra.mxu0 %v918
      %v967 = vpop.f32.mrf.mxu0
      %v968 = vadd.f32 %v945, %v967
      %969 = vdwg.mxu0
      %v971 = vrot.slane %v968, 1
      %v972 = vrot.slane %v968, 2
      %v973 = vrot.slane %v968, 3
      %v974 = vrot.slane %v968, 4
      %v975 = vrot.slane %v968, 5
      %v976 = vrot.slane %v968, 6
      %v977 = vrot.slane %v968, 7
      %v978 = vperm.slane %v968, 0
      %v979 = vperm.slane %v971, 0
      %v980 = vperm.slane %v972, 0
      %v981 = vperm.slane %v973, 0
      %v982 = vperm.slane %v974, 0
      %v983 = vperm.slane %v975, 0
      %v984 = vperm.slane %v976, 0
      %v985 = vperm.slane %v977, 0
      %v994 = vadd.f32 %v978, %v942
      %v995 = vadd.f32 %v979, %v942
      %v996 = vadd.f32 %v980, %v942
      %v997 = vadd.f32 %v981, %v942
      %v998 = vadd.f32 %v982, %v942
      %v999 = vadd.f32 %v983, %v942
      %v1000 = vadd.f32 %v984, %v942
      %v1001 = vadd.f32 %v985, %v942
      %v1002 = vadd.f32 %v994, %v837
      %v1003 = vadd.f32 %v995, %v840
      %v1004 = vadd.f32 %v996, %v843
      %v1005 = vadd.f32 %v997, %v846
      %v1006 = vadd.f32 %v998, %v849
      %v1007 = vadd.f32 %v999, %v852
      %v1008 = vadd.f32 %v1000, %v855
      %v1009 = vadd.f32 %v1001, %v858
      %vm1010 = vcmp.gt.f32.partialorder %v1002, 0.0
      %vm1011 = vcmp.gt.f32.partialorder %v1003, 0.0
      %vm1012 = vcmp.gt.f32.partialorder %v1004, 0.0
      %vm1013 = vcmp.gt.f32.partialorder %v1005, 0.0
      %vm1014 = vcmp.gt.f32.partialorder %v1006, 0.0
      %vm1015 = vcmp.gt.f32.partialorder %v1007, 0.0
      %vm1016 = vcmp.gt.f32.partialorder %v1008, 0.0
      %vm1017 = vcmp.gt.f32.partialorder %v1009, 0.0
      %v1018 = vmul.f32 %v1002, 0.2
      %v1019 = vmul.f32 %v1003, 0.2
      %v1020 = vmul.f32 %v1004, 0.2
      %v1021 = vmul.f32 %v1005, 0.2
      %v1022 = vmul.f32 %v1006, 0.2
      %v1023 = vmul.f32 %v1007, 0.2
      %v1024 = vmul.f32 %v1008, 0.2
      %v1025 = vmul.f32 %v1009, 0.2
      %v1026 = vsel %vm1010, %v1002, %v1018
      %v1027 = vsel %vm1011, %v1003, %v1019
      %v1028 = vsel %vm1012, %v1004, %v1020
      %v1029 = vsel %vm1013, %v1005, %v1021
      %v1030 = vsel %vm1014, %v1006, %v1022
      %v1031 = vsel %vm1015, %v1007, %v1023
      %v1032 = vsel %vm1016, %v1008, %v1024
      %v1033 = vsel %vm1017, %v1009, %v1025
      %1034 = vset.pattern.permute.xlu0 3
      %1035 = vperm.xlu0 %1034, %v781
      %v1036 = vpop.permute.xlu0 %1035
      %1038 = vset.pattern.permute.xlu0 3
      %1039 = vperm.xlu0 %1038, %v782
      %v1040 = vpop.permute.xlu0 %1039
      %1042 = vset.pattern.permute.xlu0 3
      %1043 = vperm.xlu0 %1042, %v783
      %v1044 = vpop.permute.xlu0 %1043
      %1046 = vset.pattern.permute.xlu0 3
      %1047 = vperm.xlu0 %1046, %v784
      %v1048 = vpop.permute.xlu0 %1047
      %1050 = vset.pattern.permute.xlu0 3
      %1051 = vperm.xlu0 %1050, %v785
      %v1052 = vpop.permute.xlu0 %1051
      %1054 = vset.pattern.permute.xlu0 3
      %1055 = vperm.xlu0 %1054, %v786
      %v1056 = vpop.permute.xlu0 %1055
      %1058 = vset.pattern.permute.xlu0 3
      %1059 = vperm.xlu0 %1058, %v787
      %v1060 = vpop.permute.xlu0 %1059
      %1062 = vset.pattern.permute.xlu0 3
      %1063 = vperm.xlu0 %1062, %v788
      %v1064 = vpop.permute.xlu0 %1063
      %vm1066 = vcmask 72704
      %v1068 = vsel %vm1066, %v1026, 0
      %v1071 = vsel %vm1066, %v1027, 0
      %v1074 = vsel %vm1066, %v1028, 0
      %v1077 = vsel %vm1066, %v1029, 0
      %v1080 = vsel %vm1066, %v1030, 0
      %v1083 = vsel %vm1066, %v1031, 0
      %v1086 = vsel %vm1066, %v1032, 0
      %v1089 = vsel %vm1066, %v1033, 0
      %vm1091 = vcmask 1040384
      %v1093 = vsel %vm1091, %v910, 0
      %1095 = vmatpush.msra.mxu0 0.0
      %1096 = vmatpush.msra.mxu0 0.0
      %1097 = vmatpush.msra.mxu0 0.0
      %1098 = vmatpush.msra.mxu0 0.0
      %1099 = vmatpush.msra.mxu0 0.0
      %1100 = vmatpush.msra.mxu0 0.0
      %1101 = vmatpush.msra.mxu0 0.0
      %1102 = vmatpush.msra.mxu0 0.0
      %1103 = vmatpush.msra.mxu0 0.0
      %1104 = vmatpush.msra.mxu0 0.0
      %1105 = vmatpush.msra.mxu0 0.0
      %1106 = vmatpush.msra.mxu0 0.0
      %1107 = vmatpush.msra.mxu0 0.0
      %1108 = vmatpush.msra.mxu0 0.0
      %1109 = vmatpush.msra.mxu0 %v1093
      %1110 = vmatpush.msra.mxu0 %v909
      %1111 = vmatmul.f32.gmra.mxu0 %v1068
      %v1112 = vpop.f32.mrf.mxu0
      %v1113 = vadd.f32 %v1036, %v1112
      %1114 = vmatmul.f32.gmra.mxu0 %v1071
      %v1115 = vpop.f32.mrf.mxu0
      %v1116 = vadd.f32 %v1040, %v1115
      %1117 = vmatmul.f32.gmra.mxu0 %v1074
      %v1118 = vpop.f32.mrf.mxu0
      %v1119 = vadd.f32 %v1044, %v1118
      %1120 = vmatmul.f32.gmra.mxu0 %v1077
      %v1121 = vpop.f32.mrf.mxu0
      %v1122 = vadd.f32 %v1048, %v1121
      %1123 = vmatmul.f32.gmra.mxu0 %v1080
      %v1124 = vpop.f32.mrf.mxu0
      %v1125 = vadd.f32 %v1052, %v1124
      %1126 = vmatmul.f32.gmra.mxu0 %v1083
      %v1127 = vpop.f32.mrf.mxu0
      %v1128 = vadd.f32 %v1056, %v1127
      %1129 = vmatmul.f32.gmra.mxu0 %v1086
      %v1130 = vpop.f32.mrf.mxu0
      %v1131 = vadd.f32 %v1060, %v1130
      %1132 = vmatmul.f32.gmra.mxu0 %v1089
      %v1133 = vpop.f32.mrf.mxu0
      %v1134 = vadd.f32 %v1064, %v1133
      %1135 = vdwg.mxu0
      %v1136 = vsel %vm790, %v1113, -inf
      %v1137 = vrot.slane %v1136, 4
      %v1138 = vmax.f32 %v1136, %v1137
      %v1139 = vrot.slane %v1138, 2
      %v1140 = vmax.f32 %v1138, %v1139
      %v1141 = vrot.slane %v1140, 1
      %v1142 = vmax.f32 %v1140, %v1141
      %v1143 = vsel %vm790, %v1116, -inf
      %v1144 = vrot.slane %v1143, 4
      %v1145 = vmax.f32 %v1143, %v1144
      %v1146 = vrot.slane %v1145, 2
      %v1147 = vmax.f32 %v1145, %v1146
      %v1148 = vrot.slane %v1147, 1
      %v1149 = vmax.f32 %v1147, %v1148
      %v1150 = vsel %vm790, %v1119, -inf
      %v1151 = vrot.slane %v1150, 4
      %v1152 = vmax.f32 %v1150, %v1151
      %v1153 = vrot.slane %v1152, 2
      %v1154 = vmax.f32 %v1152, %v1153
      %v1155 = vrot.slane %v1154, 1
      %v1156 = vmax.f32 %v1154, %v1155
      %v1157 = vsel %vm790, %v1122, -inf
      %v1158 = vrot.slane %v1157, 4
      %v1159 = vmax.f32 %v1157, %v1158
      %v1160 = vrot.slane %v1159, 2
      %v1161 = vmax.f32 %v1159, %v1160
      %v1162 = vrot.slane %v1161, 1
      %v1163 = vmax.f32 %v1161, %v1162
      %v1164 = vsel %vm790, %v1125, -inf
      %v1165 = vrot.slane %v1164, 4
      %v1166 = vmax.f32 %v1164, %v1165
      %v1167 = vrot.slane %v1166, 2
      %v1168 = vmax.f32 %v1166, %v1167
      %v1169 = vrot.slane %v1168, 1
      %v1170 = vmax.f32 %v1168, %v1169
      %v1171 = vsel %vm790, %v1128, -inf
      %v1172 = vrot.slane %v1171, 4
      %v1173 = vmax.f32 %v1171, %v1172
      %v1174 = vrot.slane %v1173, 2
      %v1175 = vmax.f32 %v1173, %v1174
      %v1176 = vrot.slane %v1175, 1
      %v1177 = vmax.f32 %v1175, %v1176
      %v1178 = vsel %vm790, %v1131, -inf
      %v1179 = vrot.slane %v1178, 4
      %v1180 = vmax.f32 %v1178, %v1179
      %v1181 = vrot.slane %v1180, 2
      %v1182 = vmax.f32 %v1180, %v1181
      %v1183 = vrot.slane %v1182, 1
      %v1184 = vmax.f32 %v1182, %v1183
      %v1185 = vsel %vm790, %v1134, -inf
      %v1186 = vrot.slane %v1185, 4
      %v1187 = vmax.f32 %v1185, %v1186
      %v1188 = vrot.slane %v1187, 2
      %v1189 = vmax.f32 %v1187, %v1188
      %v1190 = vrot.slane %v1189, 1
      %v1191 = vmax.f32 %v1189, %v1190
      %v1192 = vsub.f32 %v1113, %v1142
      %v1193 = vsub.f32 %v1116, %v1149
      %v1194 = vsub.f32 %v1119, %v1156
      %v1195 = vsub.f32 %v1122, %v1163
      %v1196 = vsub.f32 %v1125, %v1170
      %v1197 = vsub.f32 %v1128, %v1177
      %v1198 = vsub.f32 %v1131, %v1184
      %v1199 = vsub.f32 %v1134, %v1191
      %v1200 = vmul.f32 %v1192, 1.442695
      %v1201 = vpow.pop %v1200
      %v1202 = vmul.f32 %v1193, 1.442695
      %v1203 = vpow.pop %v1202
      %v1204 = vmul.f32 %v1194, 1.442695
      %v1205 = vpow.pop %v1204
      %v1206 = vmul.f32 %v1195, 1.442695
      %v1207 = vpow.pop %v1206
      %v1208 = vmul.f32 %v1196, 1.442695
      %v1209 = vpow.pop %v1208
      %v1210 = vmul.f32 %v1197, 1.442695
      %v1211 = vpow.pop %v1210
      %v1212 = vmul.f32 %v1198, 1.442695
      %v1213 = vpow.pop %v1212
      %v1214 = vmul.f32 %v1199, 1.442695
      %v1215 = vpow.pop %v1214
      %v1216 = vsel %vm790, %v1201, 0.0
      %v1217 = vrot.slane %v1216, 4
      %v1218 = vadd.f32 %v1216, %v1217
      %v1219 = vrot.slane %v1218, 2
      %v1220 = vadd.f32 %v1218, %v1219
      %v1221 = vrot.slane %v1220, 1
      %v1222 = vadd.f32 %v1220, %v1221
      %v1223 = vsel %vm790, %v1203, 0.0
      %v1224 = vrot.slane %v1223, 4
      %v1225 = vadd.f32 %v1223, %v1224
      %v1226 = vrot.slane %v1225, 2
      %v1227 = vadd.f32 %v1225, %v1226
      %v1228 = vrot.slane %v1227, 1
      %v1229 = vadd.f32 %v1227, %v1228
      %v1230 = vsel %vm790, %v1205, 0.0
      %v1231 = vrot.slane %v1230, 4
      %v1232 = vadd.f32 %v1230, %v1231
      %v1233 = vrot.slane %v1232, 2
      %v1234 = vadd.f32 %v1232, %v1233
      %v1235 = vrot.slane %v1234, 1
      %v1236 = vadd.f32 %v1234, %v1235
      %v1237 = vsel %vm790, %v1207, 0.0
      %v1238 = vrot.slane %v1237, 4
      %v1239 = vadd.f32 %v1237, %v1238
      %v1240 = vrot.slane %v1239, 2
      %v1241 = vadd.f32 %v1239, %v1240
      %v1242 = vrot.slane %v1241, 1
      %v1243 = vadd.f32 %v1241, %v1242
      %v1244 = vsel %vm790, %v1209, 0.0
      %v1245 = vrot.slane %v1244, 4
      %v1246 = vadd.f32 %v1244, %v1245
      %v1247 = vrot.slane %v1246, 2
      %v1248 = vadd.f32 %v1246, %v1247
      %v1249 = vrot.slane %v1248, 1
      %v1250 = vadd.f32 %v1248, %v1249
      %v1251 = vsel %vm790, %v1211, 0.0
      %v1252 = vrot.slane %v1251, 4
      %v1253 = vadd.f32 %v1251, %v1252
      %v1254 = vrot.slane %v1253, 2
      %v1255 = vadd.f32 %v1253, %v1254
      %v1256 = vrot.slane %v1255, 1
      %v1257 = vadd.f32 %v1255, %v1256
      %v1258 = vsel %vm790, %v1213, 0.0
      %v1259 = vrot.slane %v1258, 4
      %v1260 = vadd.f32 %v1258, %v1259
      %v1261 = vrot.slane %v1260, 2
      %v1262 = vadd.f32 %v1260, %v1261
      %v1263 = vrot.slane %v1262, 1
      %v1264 = vadd.f32 %v1262, %v1263
      %v1265 = vsel %vm790, %v1215, 0.0
      %v1266 = vrot.slane %v1265, 4
      %v1267 = vadd.f32 %v1265, %v1266
      %v1268 = vrot.slane %v1267, 2
      %v1269 = vadd.f32 %v1267, %v1268
      %v1270 = vrot.slane %v1269, 1
      %v1271 = vadd.f32 %v1269, %v1270
      %v1272 = vrcp.pop %v1222
      %v1273 = vmul.f32 %v1222, %v1272
      %v1274 = vsub.f32 1.0, %v1273
      %v1275 = vmul.f32 %v1272, %v1274
      %v1276 = vadd.f32 %v1272, %v1275
      %vm1277 = vweird.f32 %v1222
      %vm1278 = vweird.f32 %v1272
      %vm1279 = vmor %vm1277, %vm1278
      %v1280 = vsel %vm1279, %v1272, %v1276
      %v1281 = vand.u32 2147483647, %v1222
      %vm1282 = vcmp.eq.f32.partialorder %v1281, 8.507059e+37
      %v1283 = vand.u32 %v1222, 2147483648
      %v1284 = vor.u32 1.1754944e-38, %v1283
      %v1285 = vsel %vm1282, %v1284, %v1280
      %v1286 = vrcp.pop %v1229
      %v1287 = vmul.f32 %v1229, %v1286
      %v1288 = vsub.f32 1.0, %v1287
      %v1289 = vmul.f32 %v1286, %v1288
      %v1290 = vadd.f32 %v1286, %v1289
      %vm1291 = vweird.f32 %v1229
      %vm1292 = vweird.f32 %v1286
      %vm1293 = vmor %vm1291, %vm1292
      %v1294 = vsel %vm1293, %v1286, %v1290
      %v1295 = vand.u32 2147483647, %v1229
      %vm1296 = vcmp.eq.f32.partialorder %v1295, 8.507059e+37
      %v1297 = vand.u32 %v1229, 2147483648
      %v1298 = vor.u32 1.1754944e-38, %v1297
      %v1299 = vsel %vm1296, %v1298, %v1294
      %v1300 = vrcp.pop %v1236
      %v1301 = vmul.f32 %v1236, %v1300
      %v1302 = vsub.f32 1.0, %v1301
      %v1303 = vmul.f32 %v1300, %v1302
      %v1304 = vadd.f32 %v1300, %v1303
      %vm1305 = vweird.f32 %v1236
      %vm1306 = vweird.f32 %v1300
      %vm1307 = vmor %vm1305, %vm1306
      %v1308 = vsel %vm1307, %v1300, %v1304
      %v1309 = vand.u32 2147483647, %v1236
      %vm1310 = vcmp.eq.f32.partialorder %v1309, 8.507059e+37
      %v1311 = vand.u32 %v1236, 2147483648
      %v1312 = vor.u32 1.1754944e-38, %v1311
      %v1313 = vsel %vm1310, %v1312, %v1308
      %v1314 = vrcp.pop %v1243
      %v1315 = vmul.f32 %v1243, %v1314
      %v1316 = vsub.f32 1.0, %v1315
      %v1317 = vmul.f32 %v1314, %v1316
      %v1318 = vadd.f32 %v1314, %v1317
      %vm1319 = vweird.f32 %v1243
      %vm1320 = vweird.f32 %v1314
      %vm1321 = vmor %vm1319, %vm1320
      %v1322 = vsel %vm1321, %v1314, %v1318
      %v1323 = vand.u32 2147483647, %v1243
      %vm1324 = vcmp.eq.f32.partialorder %v1323, 8.507059e+37
      %v1325 = vand.u32 %v1243, 2147483648
      %v1326 = vor.u32 1.1754944e-38, %v1325
      %v1327 = vsel %vm1324, %v1326, %v1322
      %v1328 = vrcp.pop %v1250
      %v1329 = vmul.f32 %v1250, %v1328
      %v1330 = vsub.f32 1.0, %v1329
      %v1331 = vmul.f32 %v1328, %v1330
      %v1332 = vadd.f32 %v1328, %v1331
      %vm1333 = vweird.f32 %v1250
      %vm1334 = vweird.f32 %v1328
      %vm1335 = vmor %vm1333, %vm1334
      %v1336 = vsel %vm1335, %v1328, %v1332
      %v1337 = vand.u32 2147483647, %v1250
      %vm1338 = vcmp.eq.f32.partialorder %v1337, 8.507059e+37
      %v1339 = vand.u32 %v1250, 2147483648
      %v1340 = vor.u32 1.1754944e-38, %v1339
      %v1341 = vsel %vm1338, %v1340, %v1336
      %v1342 = vrcp.pop %v1257
      %v1343 = vmul.f32 %v1257, %v1342
      %v1344 = vsub.f32 1.0, %v1343
      %v1345 = vmul.f32 %v1342, %v1344
      %v1346 = vadd.f32 %v1342, %v1345
      %vm1347 = vweird.f32 %v1257
      %vm1348 = vweird.f32 %v1342
      %vm1349 = vmor %vm1347, %vm1348
      %v1350 = vsel %vm1349, %v1342, %v1346
      %v1351 = vand.u32 2147483647, %v1257
      %vm1352 = vcmp.eq.f32.partialorder %v1351, 8.507059e+37
      %v1353 = vand.u32 %v1257, 2147483648
      %v1354 = vor.u32 1.1754944e-38, %v1353
      %v1355 = vsel %vm1352, %v1354, %v1350
      %v1356 = vrcp.pop %v1264
      %v1357 = vmul.f32 %v1264, %v1356
      %v1358 = vsub.f32 1.0, %v1357
      %v1359 = vmul.f32 %v1356, %v1358
      %v1360 = vadd.f32 %v1356, %v1359
      %vm1361 = vweird.f32 %v1264
      %vm1362 = vweird.f32 %v1356
      %vm1363 = vmor %vm1361, %vm1362
      %v1364 = vsel %vm1363, %v1356, %v1360
      %v1365 = vand.u32 2147483647, %v1264
      %vm1366 = vcmp.eq.f32.partialorder %v1365, 8.507059e+37
      %v1367 = vand.u32 %v1264, 2147483648
      %v1368 = vor.u32 1.1754944e-38, %v1367
      %v1369 = vsel %vm1366, %v1368, %v1364
      %v1370 = vrcp.pop %v1271
      %v1371 = vmul.f32 %v1271, %v1370
      %v1372 = vsub.f32 1.0, %v1371
      %v1373 = vmul.f32 %v1370, %v1372
      %v1374 = vadd.f32 %v1370, %v1373
      %vm1375 = vweird.f32 %v1271
      %vm1376 = vweird.f32 %v1370
      %vm1377 = vmor %vm1375, %vm1376
      %v1378 = vsel %vm1377, %v1370, %v1374
      %v1379 = vand.u32 2147483647, %v1271
      %vm1380 = vcmp.eq.f32.partialorder %v1379, 8.507059e+37
      %v1381 = vand.u32 %v1271, 2147483648
      %v1382 = vor.u32 1.1754944e-38, %v1381
      %v1383 = vsel %vm1380, %v1382, %v1378
      %v1384 = vmul.f32 %v1201, %v1285
      %v1385 = vmul.f32 %v1203, %v1299
      %v1386 = vmul.f32 %v1205, %v1313
      %v1387 = vmul.f32 %v1207, %v1327
      %v1388 = vmul.f32 %v1209, %v1341
      %v1389 = vmul.f32 %v1211, %v1355
      %v1390 = vmul.f32 %v1213, %v1369
      %v1391 = vmul.f32 %v1215, %v1383
      %v1393 = vsel %vm790, %v1384, 0
      %v1396 = vsel %vm790, %v1385, 0
      %v1399 = vsel %vm790, %v1386, 0
      %v1402 = vsel %vm790, %v1387, 0
      %v1405 = vsel %vm790, %v1388, 0
      %v1408 = vsel %vm790, %v1389, 0
      %v1411 = vsel %vm790, %v1390, 0
      %v1414 = vsel %vm790, %v1391, 0
      %v1417 = vsel %vm815, %v911, 0
      %1419 = vmatpush.msra.mxu0 0.0
      %1420 = vmatpush.msra.mxu0 0.0
      %1421 = vmatpush.msra.mxu0 0.0
      %1422 = vmatpush.msra.mxu0 0.0
      %1423 = vmatpush.msra.mxu0 0.0
      %1424 = vmatpush.msra.mxu0 0.0
      %1425 = vmatpush.msra.mxu0 0.0
      %1426 = vmatpush.msra.mxu0 0.0
      %1427 = vmatpush.msra.mxu0 0.0
      %1428 = vmatpush.msra.mxu0 0.0
      %1429 = vmatpush.msra.mxu0 0.0
      %1430 = vmatpush.msra.mxu0 0.0
      %1431 = vmatpush.msra.mxu0 0.0
      %1432 = vmatpush.msra.mxu0 0.0
      %1433 = vmatpush.msra.mxu0 0.0
      %1434 = vmatpush.msra.mxu0 %v1417
      %1435 = vmatmul.f32.gmra.mxu0 %v1393
      %v1436 = vpop.f32.mrf.mxu0
      %v1437 = vadd.f32 0.0, %v1436
      %1438 = vmatmul.f32.gmra.mxu0 %v1396
      %v1439 = vpop.f32.mrf.mxu0
      %v1440 = vadd.f32 0.0, %v1439
      %1441 = vmatmul.f32.gmra.mxu0 %v1399
      %v1442 = vpop.f32.mrf.mxu0
      %v1443 = vadd.f32 0.0, %v1442
      %1444 = vmatmul.f32.gmra.mxu0 %v1402
      %v1445 = vpop.f32.mrf.mxu0
      %v1446 = vadd.f32 0.0, %v1445
      %1447 = vmatmul.f32.gmra.mxu0 %v1405
      %v1448 = vpop.f32.mrf.mxu0
      %v1449 = vadd.f32 0.0, %v1448
      %1450 = vmatmul.f32.gmra.mxu0 %v1408
      %v1451 = vpop.f32.mrf.mxu0
      %v1452 = vadd.f32 0.0, %v1451
      %1453 = vmatmul.f32.gmra.mxu0 %v1411
      %v1454 = vpop.f32.mrf.mxu0
      %v1455 = vadd.f32 0.0, %v1454
      %1456 = vmatmul.f32.gmra.mxu0 %v1414
      %v1457 = vpop.f32.mrf.mxu0
      %v1458 = vadd.f32 0.0, %v1457
      %1459 = vdwg.mxu0
      %v1460 = vmul.f32 %v1437, %v942
      %v1461 = vmul.f32 %v1440, %v942
      %v1462 = vmul.f32 %v1443, %v942
      %v1463 = vmul.f32 %v1446, %v942
      %v1464 = vmul.f32 %v1449, %v942
      %v1465 = vmul.f32 %v1452, %v942
      %v1466 = vmul.f32 %v1455, %v942
      %v1467 = vmul.f32 %v1458, %v942
      %v1468 = vsel %vm1066, %v1460, 0.0
      %v1469 = vrot.slane %v1468, 4
      %v1470 = vadd.f32 %v1468, %v1469
      %v1471 = vrot.slane %v1470, 2
      %v1472 = vadd.f32 %v1470, %v1471
      %v1473 = vrot.slane %v1472, 1
      %v1474 = vadd.f32 %v1472, %v1473
      %v1475 = vsel %vm1066, %v1461, 0.0
      %v1476 = vrot.slane %v1475, 4
      %v1477 = vadd.f32 %v1475, %v1476
      %v1478 = vrot.slane %v1477, 2
      %v1479 = vadd.f32 %v1477, %v1478
      %v1480 = vrot.slane %v1479, 1
      %v1481 = vadd.f32 %v1479, %v1480
      %v1482 = vsel %vm1066, %v1462, 0.0
      %v1483 = vrot.slane %v1482, 4
      %v1484 = vadd.f32 %v1482, %v1483
      %v1485 = vrot.slane %v1484, 2
      %v1486 = vadd.f32 %v1484, %v1485
      %v1487 = vrot.slane %v1486, 1
      %v1488 = vadd.f32 %v1486, %v1487
      %v1489 = vsel %vm1066, %v1463, 0.0
      %v1490 = vrot.slane %v1489, 4
      %v1491 = vadd.f32 %v1489, %v1490
      %v1492 = vrot.slane %v1491, 2
      %v1493 = vadd.f32 %v1491, %v1492
      %v1494 = vrot.slane %v1493, 1
      %v1495 = vadd.f32 %v1493, %v1494
      %v1496 = vsel %vm1066, %v1464, 0.0
      %v1497 = vrot.slane %v1496, 4
      %v1498 = vadd.f32 %v1496, %v1497
      %v1499 = vrot.slane %v1498, 2
      %v1500 = vadd.f32 %v1498, %v1499
      %v1501 = vrot.slane %v1500, 1
      %v1502 = vadd.f32 %v1500, %v1501
      %v1503 = vsel %vm1066, %v1465, 0.0
      %v1504 = vrot.slane %v1503, 4
      %v1505 = vadd.f32 %v1503, %v1504
      %v1506 = vrot.slane %v1505, 2
      %v1507 = vadd.f32 %v1505, %v1506
      %v1508 = vrot.slane %v1507, 1
      %v1509 = vadd.f32 %v1507, %v1508
      %v1510 = vsel %vm1066, %v1466, 0.0
      %v1511 = vrot.slane %v1510, 4
      %v1512 = vadd.f32 %v1510, %v1511
      %v1513 = vrot.slane %v1512, 2
      %v1514 = vadd.f32 %v1512, %v1513
      %v1515 = vrot.slane %v1514, 1
      %v1516 = vadd.f32 %v1514, %v1515
      %v1517 = vsel %vm1066, %v1467, 0.0
      %v1518 = vrot.slane %v1517, 4
      %v1519 = vadd.f32 %v1517, %v1518
      %v1520 = vrot.slane %v1519, 2
      %v1521 = vadd.f32 %v1519, %v1520
      %v1522 = vrot.slane %v1521, 1
      %v1523 = vadd.f32 %v1521, %v1522
      %v1525 = vperm.slane %v912, 0
      %v1527 = vadd.f32 %v1474, %v1525
      %v1528 = vadd.f32 %v1481, %v1525
      %v1529 = vadd.f32 %v1488, %v1525
      %v1530 = vadd.f32 %v1495, %v1525
      %v1531 = vadd.f32 %v1502, %v1525
      %v1532 = vadd.f32 %v1509, %v1525
      %v1533 = vadd.f32 %v1516, %v1525
      %v1534 = vadd.f32 %v1523, %v1525
      %v1535 = vmax.f32 %v1527, 0.0
      %v1536 = vmax.f32 %v1528, 0.0
      %v1537 = vmax.f32 %v1529, 0.0
      %v1538 = vmax.f32 %v1530, 0.0
      %v1539 = vmax.f32 %v1531, 0.0
      %v1540 = vmax.f32 %v1532, 0.0
      %v1541 = vmax.f32 %v1533, 0.0
      %v1542 = vmax.f32 %v1534, 0.0
      %v1543 = vld [vmem:[%s11] sm:$0xff]
      %v1544 = vld [vmem:[%s11 + $0x8] sm:$0x1]
      %v1545 = vld [vmem:[%s12] sm:$0x1]
      %v1546 = vld [vmem:[%s13] sm:$0xff]
      %v1547 = vld [vmem:[%s13 + $0x8] sm:$0x1]
      %v1548 = vld [vmem:[%s14] sm:$0x1]
      %v1549 = vld [vmem:[%s15] sm:$0xff]
      %v1550 = vld [vmem:[%s15 + $0x8] sm:$0xff]
      %v1551 = vld [vmem:[%s15 + $0x10] sm:$0xf]
      %v1552 = vld [vmem:[%s16] sm:$0xf]
      %v1553 = vld [vmem:[%s17] sm:$0x1]
      %v1555 = vperm.slane %v1545, 0
      %v1565 = vrot.slane %v1536, 7
      %vm1566 = vcmask 1041409
      %v1567 = vsel %vm1566, %v1565, %v1535
      %v1568 = vrot.slane %v1537, 6
      %vm1569 = vcmask 1042434
      %v1570 = vsel %vm1569, %v1568, %v1567
      %v1571 = vrot.slane %v1538, 5
      %vm1572 = vcmask 1043459
      %v1573 = vsel %vm1572, %v1571, %v1570
      %v1574 = vrot.slane %v1539, 4
      %vm1575 = vcmask 1044484
      %v1576 = vsel %vm1575, %v1574, %v1573
      %v1577 = vrot.slane %v1540, 3
      %vm1578 = vcmask 1045509
      %v1579 = vsel %vm1578, %v1577, %v1576
      %v1580 = vrot.slane %v1541, 2
      %vm1581 = vcmask 1046534
      %v1582 = vsel %vm1581, %v1580, %v1579
      %v1583 = vrot.slane %v1542, 1
      %vm1584 = vcmask 1047559
      %v1585 = vsel %vm1584, %v1583, %v1582
      %v1586 = vsel %vm1066, %v1585, 0
      %v1589 = vsel %vm1091, %v1544, 0
      %1591 = vmatpush.msra.mxu0 0.0
      %1592 = vmatpush.msra.mxu0 0.0
      %1593 = vmatpush.msra.mxu0 0.0
      %1594 = vmatpush.msra.mxu0 0.0
      %1595 = vmatpush.msra.mxu0 0.0
      %1596 = vmatpush.msra.mxu0 0.0
      %1597 = vmatpush.msra.mxu0 0.0
      %1598 = vmatpush.msra.mxu0 0.0
      %1599 = vmatpush.msra.mxu0 0.0
      %1600 = vmatpush.msra.mxu0 0.0
      %1601 = vmatpush.msra.mxu0 0.0
      %1602 = vmatpush.msra.mxu0 0.0
      %1603 = vmatpush.msra.mxu0 0.0
      %1604 = vmatpush.msra.mxu0 0.0
      %1605 = vmatpush.msra.mxu0 %v1589
      %1606 = vmatpush.msra.mxu0 %v1543
      %1607 = vmatmul.f32.gmra.mxu0 %v1586
      %v1608 = vpop.f32.mrf.mxu0
      %v1609 = vadd.f32 %v1555, %v1608
      %1610 = vdwg.mxu0
      %v1612 = vperm.slane %v1548, 0
      %v1615 = vsel %vm1091, %v1547, 0
      %1617 = vmatpush.msra.mxu0 0.0
      %1618 = vmatpush.msra.mxu0 0.0
      %1619 = vmatpush.msra.mxu0 0.0
      %1620 = vmatpush.msra.mxu0 0.0
      %1621 = vmatpush.msra.mxu0 0.0
      %1622 = vmatpush.msra.mxu0 0.0
      %1623 = vmatpush.msra.mxu0 0.0
      %1624 = vmatpush.msra.mxu0 0.0
      %1625 = vmatpush.msra.mxu0 0.0
      %1626 = vmatpush.msra.mxu0 0.0
      %1627 = vmatpush.msra.mxu0 0.0
      %1628 = vmatpush.msra.mxu0 0.0
      %1629 = vmatpush.msra.mxu0 0.0
      %1630 = vmatpush.msra.mxu0 0.0
      %1631 = vmatpush.msra.mxu0 %v1615
      %1632 = vmatpush.msra.mxu0 %v1546
      %1633 = vmatmul.f32.gmra.mxu0 %v1586
      %v1634 = vpop.f32.mrf.mxu0
      %v1635 = vadd.f32 %v1612, %v1634
      %1636 = vdwg.mxu0
      %v1638 = vrot.slane %v1635, 1
      %v1639 = vrot.slane %v1635, 2
      %v1640 = vrot.slane %v1635, 3
      %v1641 = vrot.slane %v1635, 4
      %v1642 = vrot.slane %v1635, 5
      %v1643 = vrot.slane %v1635, 6
      %v1644 = vrot.slane %v1635, 7
      %v1645 = vperm.slane %v1635, 0
      %v1646 = vperm.slane %v1638, 0
      %v1647 = vperm.slane %v1639, 0
      %v1648 = vperm.slane %v1640, 0
      %v1649 = vperm.slane %v1641, 0
      %v1650 = vperm.slane %v1642, 0
      %v1651 = vperm.slane %v1643, 0
      %v1652 = vperm.slane %v1644, 0
      %v1661 = vadd.f32 %v1645, %v1609
      %v1662 = vadd.f32 %v1646, %v1609
      %v1663 = vadd.f32 %v1647, %v1609
      %v1664 = vadd.f32 %v1648, %v1609
      %v1665 = vadd.f32 %v1649, %v1609
      %v1666 = vadd.f32 %v1650, %v1609
      %v1667 = vadd.f32 %v1651, %v1609
      %v1668 = vadd.f32 %v1652, %v1609
      %v1669 = vadd.f32 %v1661, %v882
      %v1670 = vadd.f32 %v1662, %v885
      %v1671 = vadd.f32 %v1663, %v888
      %v1672 = vadd.f32 %v1664, %v891
      %v1673 = vadd.f32 %v1665, %v894
      %v1674 = vadd.f32 %v1666, %v897
      %v1675 = vadd.f32 %v1667, %v900
      %v1676 = vadd.f32 %v1668, %v903
      %vm1677 = vcmp.gt.f32.partialorder %v1669, 0.0
      %vm1678 = vcmp.gt.f32.partialorder %v1670, 0.0
      %vm1679 = vcmp.gt.f32.partialorder %v1671, 0.0
      %vm1680 = vcmp.gt.f32.partialorder %v1672, 0.0
      %vm1681 = vcmp.gt.f32.partialorder %v1673, 0.0
      %vm1682 = vcmp.gt.f32.partialorder %v1674, 0.0
      %vm1683 = vcmp.gt.f32.partialorder %v1675, 0.0
      %vm1684 = vcmp.gt.f32.partialorder %v1676, 0.0
      %v1685 = vmul.f32 %v1669, 0.2
      %v1686 = vmul.f32 %v1670, 0.2
      %v1687 = vmul.f32 %v1671, 0.2
      %v1688 = vmul.f32 %v1672, 0.2
      %v1689 = vmul.f32 %v1673, 0.2
      %v1690 = vmul.f32 %v1674, 0.2
      %v1691 = vmul.f32 %v1675, 0.2
      %v1692 = vmul.f32 %v1676, 0.2
      %v1693 = vsel %vm1677, %v1669, %v1685
      %v1694 = vsel %vm1678, %v1670, %v1686
      %v1695 = vsel %vm1679, %v1671, %v1687
      %v1696 = vsel %vm1680, %v1672, %v1688
      %v1697 = vsel %vm1681, %v1673, %v1689
      %v1698 = vsel %vm1682, %v1674, %v1690
      %v1699 = vsel %vm1683, %v1675, %v1691
      %v1700 = vsel %vm1684, %v1676, %v1692
      %vm1701 = vcmask 162816
      %v1703 = vsel %vm1701, %v1693, 0
      %v1706 = vsel %vm1701, %v1694, 0
      %v1709 = vsel %vm1701, %v1695, 0
      %v1712 = vsel %vm1701, %v1696, 0
      %v1715 = vsel %vm1701, %v1697, 0
      %v1718 = vsel %vm1701, %v1698, 0
      %v1721 = vsel %vm1701, %v1699, 0
      %v1724 = vsel %vm1701, %v1700, 0
      %v1727 = vsel %vm920, %v1551, 0
      %1729 = vmatpush.msra.mxu0 0.0
      %1730 = vmatpush.msra.mxu0 0.0
      %1731 = vmatpush.msra.mxu0 0.0
      %1732 = vmatpush.msra.mxu0 0.0
      %1733 = vmatpush.msra.mxu0 0.0
      %1734 = vmatpush.msra.mxu0 0.0
      %1735 = vmatpush.msra.mxu0 0.0
      %1736 = vmatpush.msra.mxu0 0.0
      %1737 = vmatpush.msra.mxu0 0.0
      %1738 = vmatpush.msra.mxu0 0.0
      %1739 = vmatpush.msra.mxu0 0.0
      %1740 = vmatpush.msra.mxu0 0.0
      %1741 = vmatpush.msra.mxu0 0.0
      %1742 = vmatpush.msra.mxu0 %v1727
      %1743 = vmatpush.msra.mxu0 %v1550
      %1744 = vmatpush.msra.mxu0 %v1549
      %1745 = vmatmul.f32.gmra.mxu0 %v1703
      %v1746 = vpop.f32.mrf.mxu0
      %v1747 = vadd.f32 %v1036, %v1746
      %1748 = vmatmul.f32.gmra.mxu0 %v1706
      %v1749 = vpop.f32.mrf.mxu0
      %v1750 = vadd.f32 %v1040, %v1749
      %1751 = vmatmul.f32.gmra.mxu0 %v1709
      %v1752 = vpop.f32.mrf.mxu0
      %v1753 = vadd.f32 %v1044, %v1752
      %1754 = vmatmul.f32.gmra.mxu0 %v1712
      %v1755 = vpop.f32.mrf.mxu0
      %v1756 = vadd.f32 %v1048, %v1755
      %1757 = vmatmul.f32.gmra.mxu0 %v1715
      %v1758 = vpop.f32.mrf.mxu0
      %v1759 = vadd.f32 %v1052, %v1758
      %1760 = vmatmul.f32.gmra.mxu0 %v1718
      %v1761 = vpop.f32.mrf.mxu0
      %v1762 = vadd.f32 %v1056, %v1761
      %1763 = vmatmul.f32.gmra.mxu0 %v1721
      %v1764 = vpop.f32.mrf.mxu0
      %v1765 = vadd.f32 %v1060, %v1764
      %1766 = vmatmul.f32.gmra.mxu0 %v1724
      %v1767 = vpop.f32.mrf.mxu0
      %v1768 = vadd.f32 %v1064, %v1767
      %1769 = vdwg.mxu0
      %v1770 = vsel %vm916, %v1747, -inf
      %v1771 = vrot.slane %v1770, 4
      %v1772 = vmax.f32 %v1770, %v1771
      %v1773 = vrot.slane %v1772, 2
      %v1774 = vmax.f32 %v1772, %v1773
      %v1775 = vrot.slane %v1774, 1
      %v1776 = vmax.f32 %v1774, %v1775
      %v1777 = vsel %vm916, %v1750, -inf
      %v1778 = vrot.slane %v1777, 4
      %v1779 = vmax.f32 %v1777, %v1778
      %v1780 = vrot.slane %v1779, 2
      %v1781 = vmax.f32 %v1779, %v1780
      %v1782 = vrot.slane %v1781, 1
      %v1783 = vmax.f32 %v1781, %v1782
      %v1784 = vsel %vm916, %v1753, -inf
      %v1785 = vrot.slane %v1784, 4
      %v1786 = vmax.f32 %v1784, %v1785
      %v1787 = vrot.slane %v1786, 2
      %v1788 = vmax.f32 %v1786, %v1787
      %v1789 = vrot.slane %v1788, 1
      %v1790 = vmax.f32 %v1788, %v1789
      %v1791 = vsel %vm916, %v1756, -inf
      %v1792 = vrot.slane %v1791, 4
      %v1793 = vmax.f32 %v1791, %v1792
      %v1794 = vrot.slane %v1793, 2
      %v1795 = vmax.f32 %v1793, %v1794
      %v1796 = vrot.slane %v1795, 1
      %v1797 = vmax.f32 %v1795, %v1796
      %v1798 = vsel %vm916, %v1759, -inf
      %v1799 = vrot.slane %v1798, 4
      %v1800 = vmax.f32 %v1798, %v1799
      %v1801 = vrot.slane %v1800, 2
      %v1802 = vmax.f32 %v1800, %v1801
      %v1803 = vrot.slane %v1802, 1
      %v1804 = vmax.f32 %v1802, %v1803
      %v1805 = vsel %vm916, %v1762, -inf
      %v1806 = vrot.slane %v1805, 4
      %v1807 = vmax.f32 %v1805, %v1806
      %v1808 = vrot.slane %v1807, 2
      %v1809 = vmax.f32 %v1807, %v1808
      %v1810 = vrot.slane %v1809, 1
      %v1811 = vmax.f32 %v1809, %v1810
      %v1812 = vsel %vm916, %v1765, -inf
      %v1813 = vrot.slane %v1812, 4
      %v1814 = vmax.f32 %v1812, %v1813
      %v1815 = vrot.slane %v1814, 2
      %v1816 = vmax.f32 %v1814, %v1815
      %v1817 = vrot.slane %v1816, 1
      %v1818 = vmax.f32 %v1816, %v1817
      %v1819 = vsel %vm916, %v1768, -inf
      %v1820 = vrot.slane %v1819, 4
      %v1821 = vmax.f32 %v1819, %v1820
      %v1822 = vrot.slane %v1821, 2
      %v1823 = vmax.f32 %v1821, %v1822
      %v1824 = vrot.slane %v1823, 1
      %v1825 = vmax.f32 %v1823, %v1824
      %v1826 = vsub.f32 %v1747, %v1776
      %v1827 = vsub.f32 %v1750, %v1783
      %v1828 = vsub.f32 %v1753, %v1790
      %v1829 = vsub.f32 %v1756, %v1797
      %v1830 = vsub.f32 %v1759, %v1804
      %v1831 = vsub.f32 %v1762, %v1811
      %v1832 = vsub.f32 %v1765, %v1818
      %v1833 = vsub.f32 %v1768, %v1825
      %v1834 = vmul.f32 %v1826, 1.442695
      %v1835 = vpow.pop %v1834
      %v1836 = vmul.f32 %v1827, 1.442695
      %v1837 = vpow.pop %v1836
      %v1838 = vmul.f32 %v1828, 1.442695
      %v1839 = vpow.pop %v1838
      %v1840 = vmul.f32 %v1829, 1.442695
      %v1841 = vpow.pop %v1840
      %v1842 = vmul.f32 %v1830, 1.442695
      %v1843 = vpow.pop %v1842
      %v1844 = vmul.f32 %v1831, 1.442695
      %v1845 = vpow.pop %v1844
      %v1846 = vmul.f32 %v1832, 1.442695
      %v1847 = vpow.pop %v1846
      %v1848 = vmul.f32 %v1833, 1.442695
      %v1849 = vpow.pop %v1848
      %v1850 = vsel %vm916, %v1835, 0.0
      %v1851 = vrot.slane %v1850, 4
      %v1852 = vadd.f32 %v1850, %v1851
      %v1853 = vrot.slane %v1852, 2
      %v1854 = vadd.f32 %v1852, %v1853
      %v1855 = vrot.slane %v1854, 1
      %v1856 = vadd.f32 %v1854, %v1855
      %v1857 = vsel %vm916, %v1837, 0.0
      %v1858 = vrot.slane %v1857, 4
      %v1859 = vadd.f32 %v1857, %v1858
      %v1860 = vrot.slane %v1859, 2
      %v1861 = vadd.f32 %v1859, %v1860
      %v1862 = vrot.slane %v1861, 1
      %v1863 = vadd.f32 %v1861, %v1862
      %v1864 = vsel %vm916, %v1839, 0.0
      %v1865 = vrot.slane %v1864, 4
      %v1866 = vadd.f32 %v1864, %v1865
      %v1867 = vrot.slane %v1866, 2
      %v1868 = vadd.f32 %v1866, %v1867
      %v1869 = vrot.slane %v1868, 1
      %v1870 = vadd.f32 %v1868, %v1869
      %v1871 = vsel %vm916, %v1841, 0.0
      %v1872 = vrot.slane %v1871, 4
      %v1873 = vadd.f32 %v1871, %v1872
      %v1874 = vrot.slane %v1873, 2
      %v1875 = vadd.f32 %v1873, %v1874
      %v1876 = vrot.slane %v1875, 1
      %v1877 = vadd.f32 %v1875, %v1876
      %v1878 = vsel %vm916, %v1843, 0.0
      %v1879 = vrot.slane %v1878, 4
      %v1880 = vadd.f32 %v1878, %v1879
      %v1881 = vrot.slane %v1880, 2
      %v1882 = vadd.f32 %v1880, %v1881
      %v1883 = vrot.slane %v1882, 1
      %v1884 = vadd.f32 %v1882, %v1883
      %v1885 = vsel %vm916, %v1845, 0.0
      %v1886 = vrot.slane %v1885, 4
      %v1887 = vadd.f32 %v1885, %v1886
      %v1888 = vrot.slane %v1887, 2
      %v1889 = vadd.f32 %v1887, %v1888
      %v1890 = vrot.slane %v1889, 1
      %v1891 = vadd.f32 %v1889, %v1890
      %v1892 = vsel %vm916, %v1847, 0.0
      %v1893 = vrot.slane %v1892, 4
      %v1894 = vadd.f32 %v1892, %v1893
      %v1895 = vrot.slane %v1894, 2
      %v1896 = vadd.f32 %v1894, %v1895
      %v1897 = vrot.slane %v1896, 1
      %v1898 = vadd.f32 %v1896, %v1897
      %v1899 = vsel %vm916, %v1849, 0.0
      %v1900 = vrot.slane %v1899, 4
      %v1901 = vadd.f32 %v1899, %v1900
      %v1902 = vrot.slane %v1901, 2
      %v1903 = vadd.f32 %v1901, %v1902
      %v1904 = vrot.slane %v1903, 1
      %v1905 = vadd.f32 %v1903, %v1904
      %v1906 = vrcp.pop %v1856
      %v1907 = vmul.f32 %v1856, %v1906
      %v1908 = vsub.f32 1.0, %v1907
      %v1909 = vmul.f32 %v1906, %v1908
      %v1910 = vadd.f32 %v1906, %v1909
      %vm1911 = vweird.f32 %v1856
      %vm1912 = vweird.f32 %v1906
      %vm1913 = vmor %vm1911, %vm1912
      %v1914 = vsel %vm1913, %v1906, %v1910
      %v1915 = vand.u32 2147483647, %v1856
      %vm1916 = vcmp.eq.f32.partialorder %v1915, 8.507059e+37
      %v1917 = vand.u32 %v1856, 2147483648
      %v1918 = vor.u32 1.1754944e-38, %v1917
      %v1919 = vsel %vm1916, %v1918, %v1914
      %v1920 = vrcp.pop %v1863
      %v1921 = vmul.f32 %v1863, %v1920
      %v1922 = vsub.f32 1.0, %v1921
      %v1923 = vmul.f32 %v1920, %v1922
      %v1924 = vadd.f32 %v1920, %v1923
      %vm1925 = vweird.f32 %v1863
      %vm1926 = vweird.f32 %v1920
      %vm1927 = vmor %vm1925, %vm1926
      %v1928 = vsel %vm1927, %v1920, %v1924
      %v1929 = vand.u32 2147483647, %v1863
      %vm1930 = vcmp.eq.f32.partialorder %v1929, 8.507059e+37
      %v1931 = vand.u32 %v1863, 2147483648
      %v1932 = vor.u32 1.1754944e-38, %v1931
      %v1933 = vsel %vm1930, %v1932, %v1928
      %v1934 = vrcp.pop %v1870
      %v1935 = vmul.f32 %v1870, %v1934
      %v1936 = vsub.f32 1.0, %v1935
      %v1937 = vmul.f32 %v1934, %v1936
      %v1938 = vadd.f32 %v1934, %v1937
      %vm1939 = vweird.f32 %v1870
      %vm1940 = vweird.f32 %v1934
      %vm1941 = vmor %vm1939, %vm1940
      %v1942 = vsel %vm1941, %v1934, %v1938
      %v1943 = vand.u32 2147483647, %v1870
      %vm1944 = vcmp.eq.f32.partialorder %v1943, 8.507059e+37
      %v1945 = vand.u32 %v1870, 2147483648
      %v1946 = vor.u32 1.1754944e-38, %v1945
      %v1947 = vsel %vm1944, %v1946, %v1942
      %v1948 = vrcp.pop %v1877
      %v1949 = vmul.f32 %v1877, %v1948
      %v1950 = vsub.f32 1.0, %v1949
      %v1951 = vmul.f32 %v1948, %v1950
      %v1952 = vadd.f32 %v1948, %v1951
      %vm1953 = vweird.f32 %v1877
      %vm1954 = vweird.f32 %v1948
      %vm1955 = vmor %vm1953, %vm1954
      %v1956 = vsel %vm1955, %v1948, %v1952
      %v1957 = vand.u32 2147483647, %v1877
      %vm1958 = vcmp.eq.f32.partialorder %v1957, 8.507059e+37
      %v1959 = vand.u32 %v1877, 2147483648
      %v1960 = vor.u32 1.1754944e-38, %v1959
      %v1961 = vsel %vm1958, %v1960, %v1956
      %v1962 = vrcp.pop %v1884
      %v1963 = vmul.f32 %v1884, %v1962
      %v1964 = vsub.f32 1.0, %v1963
      %v1965 = vmul.f32 %v1962, %v1964
      %v1966 = vadd.f32 %v1962, %v1965
      %vm1967 = vweird.f32 %v1884
      %vm1968 = vweird.f32 %v1962
      %vm1969 = vmor %vm1967, %vm1968
      %v1970 = vsel %vm1969, %v1962, %v1966
      %v1971 = vand.u32 2147483647, %v1884
      %vm1972 = vcmp.eq.f32.partialorder %v1971, 8.507059e+37
      %v1973 = vand.u32 %v1884, 2147483648
      %v1974 = vor.u32 1.1754944e-38, %v1973
      %v1975 = vsel %vm1972, %v1974, %v1970
      %v1976 = vrcp.pop %v1891
      %v1977 = vmul.f32 %v1891, %v1976
      %v1978 = vsub.f32 1.0, %v1977
      %v1979 = vmul.f32 %v1976, %v1978
      %v1980 = vadd.f32 %v1976, %v1979
      %vm1981 = vweird.f32 %v1891
      %vm1982 = vweird.f32 %v1976
      %vm1983 = vmor %vm1981, %vm1982
      %v1984 = vsel %vm1983, %v1976, %v1980
      %v1985 = vand.u32 2147483647, %v1891
      %vm1986 = vcmp.eq.f32.partialorder %v1985, 8.507059e+37
      %v1987 = vand.u32 %v1891, 2147483648
      %v1988 = vor.u32 1.1754944e-38, %v1987
      %v1989 = vsel %vm1986, %v1988, %v1984
      %v1990 = vrcp.pop %v1898
      %v1991 = vmul.f32 %v1898, %v1990
      %v1992 = vsub.f32 1.0, %v1991
      %v1993 = vmul.f32 %v1990, %v1992
      %v1994 = vadd.f32 %v1990, %v1993
      %vm1995 = vweird.f32 %v1898
      %vm1996 = vweird.f32 %v1990
      %vm1997 = vmor %vm1995, %vm1996
      %v1998 = vsel %vm1997, %v1990, %v1994
      %v1999 = vand.u32 2147483647, %v1898
      %vm2000 = vcmp.eq.f32.partialorder %v1999, 8.507059e+37
      %v2001 = vand.u32 %v1898, 2147483648
      %v2002 = vor.u32 1.1754944e-38, %v2001
      %v2003 = vsel %vm2000, %v2002, %v1998
      %v2004 = vrcp.pop %v1905
      %v2005 = vmul.f32 %v1905, %v2004
      %v2006 = vsub.f32 1.0, %v2005
      %v2007 = vmul.f32 %v2004, %v2006
      %v2008 = vadd.f32 %v2004, %v2007
      %vm2009 = vweird.f32 %v1905
      %vm2010 = vweird.f32 %v2004
      %vm2011 = vmor %vm2009, %vm2010
      %v2012 = vsel %vm2011, %v2004, %v2008
      %v2013 = vand.u32 2147483647, %v1905
      %vm2014 = vcmp.eq.f32.partialorder %v2013, 8.507059e+37
      %v2015 = vand.u32 %v1905, 2147483648
      %v2016 = vor.u32 1.1754944e-38, %v2015
      %v2017 = vsel %vm2014, %v2016, %v2012
      %v2018 = vmul.f32 %v1835, %v1919
      %v2019 = vmul.f32 %v1837, %v1933
      %v2020 = vmul.f32 %v1839, %v1947
      %v2021 = vmul.f32 %v1841, %v1961
      %v2022 = vmul.f32 %v1843, %v1975
      %v2023 = vmul.f32 %v1845, %v1989
      %v2024 = vmul.f32 %v1847, %v2003
      %v2025 = vmul.f32 %v1849, %v2017
      %v2027 = vsel %vm916, %v2018, 0
      %v2030 = vsel %vm916, %v2019, 0
      %v2033 = vsel %vm916, %v2020, 0
      %v2036 = vsel %vm916, %v2021, 0
      %v2039 = vsel %vm916, %v2022, 0
      %v2042 = vsel %vm916, %v2023, 0
      %v2045 = vsel %vm916, %v2024, 0
      %v2048 = vsel %vm916, %v2025, 0
      %v2051 = vsel %vm920, %v1552, 0
      %2053 = vmatpush.msra.mxu0 0.0
      %2054 = vmatpush.msra.mxu0 0.0
      %2055 = vmatpush.msra.mxu0 0.0
      %2056 = vmatpush.msra.mxu0 0.0
      %2057 = vmatpush.msra.mxu0 0.0
      %2058 = vmatpush.msra.mxu0 0.0
      %2059 = vmatpush.msra.mxu0 0.0
      %2060 = vmatpush.msra.mxu0 0.0
      %2061 = vmatpush.msra.mxu0 0.0
      %2062 = vmatpush.msra.mxu0 0.0
      %2063 = vmatpush.msra.mxu0 0.0
      %2064 = vmatpush.msra.mxu0 0.0
      %2065 = vmatpush.msra.mxu0 0.0
      %2066 = vmatpush.msra.mxu0 0.0
      %2067 = vmatpush.msra.mxu0 0.0
      %2068 = vmatpush.msra.mxu0 %v2051
      %2069 = vmatmul.f32.gmra.mxu0 %v2027
      %v2070 = vpop.f32.mrf.mxu0
      %v2071 = vadd.f32 0.0, %v2070
      %2072 = vmatmul.f32.gmra.mxu0 %v2030
      %v2073 = vpop.f32.mrf.mxu0
      %v2074 = vadd.f32 0.0, %v2073
      %2075 = vmatmul.f32.gmra.mxu0 %v2033
      %v2076 = vpop.f32.mrf.mxu0
      %v2077 = vadd.f32 0.0, %v2076
      %2078 = vmatmul.f32.gmra.mxu0 %v2036
      %v2079 = vpop.f32.mrf.mxu0
      %v2080 = vadd.f32 0.0, %v2079
      %2081 = vmatmul.f32.gmra.mxu0 %v2039
      %v2082 = vpop.f32.mrf.mxu0
      %v2083 = vadd.f32 0.0, %v2082
      %2084 = vmatmul.f32.gmra.mxu0 %v2042
      %v2085 = vpop.f32.mrf.mxu0
      %v2086 = vadd.f32 0.0, %v2085
      %2087 = vmatmul.f32.gmra.mxu0 %v2045
      %v2088 = vpop.f32.mrf.mxu0
      %v2089 = vadd.f32 0.0, %v2088
      %2090 = vmatmul.f32.gmra.mxu0 %v2048
      %v2091 = vpop.f32.mrf.mxu0
      %v2092 = vadd.f32 0.0, %v2091
      %2093 = vdwg.mxu0
      %v2094 = vmul.f32 %v2071, %v1609
      %v2095 = vmul.f32 %v2074, %v1609
      %v2096 = vmul.f32 %v2077, %v1609
      %v2097 = vmul.f32 %v2080, %v1609
      %v2098 = vmul.f32 %v2083, %v1609
      %v2099 = vmul.f32 %v2086, %v1609
      %v2100 = vmul.f32 %v2089, %v1609
      %v2101 = vmul.f32 %v2092, %v1609
      %v2102 = vsel %vm1701, %v2094, 0.0
      %v2103 = vrot.slane %v2102, 4
      %v2104 = vadd.f32 %v2102, %v2103
      %v2105 = vrot.slane %v2104, 2
      %v2106 = vadd.f32 %v2104, %v2105
      %v2107 = vrot.slane %v2106, 1
      %v2108 = vadd.f32 %v2106, %v2107
      %v2109 = vsel %vm1701, %v2095, 0.0
      %v2110 = vrot.slane %v2109, 4
      %v2111 = vadd.f32 %v2109, %v2110
      %v2112 = vrot.slane %v2111, 2
      %v2113 = vadd.f32 %v2111, %v2112
      %v2114 = vrot.slane %v2113, 1
      %v2115 = vadd.f32 %v2113, %v2114
      %v2116 = vsel %vm1701, %v2096, 0.0
      %v2117 = vrot.slane %v2116, 4
      %v2118 = vadd.f32 %v2116, %v2117
      %v2119 = vrot.slane %v2118, 2
      %v2120 = vadd.f32 %v2118, %v2119
      %v2121 = vrot.slane %v2120, 1
      %v2122 = vadd.f32 %v2120, %v2121
      %v2123 = vsel %vm1701, %v2097, 0.0
      %v2124 = vrot.slane %v2123, 4
      %v2125 = vadd.f32 %v2123, %v2124
      %v2126 = vrot.slane %v2125, 2
      %v2127 = vadd.f32 %v2125, %v2126
      %v2128 = vrot.slane %v2127, 1
      %v2129 = vadd.f32 %v2127, %v2128
      %v2130 = vsel %vm1701, %v2098, 0.0
      %v2131 = vrot.slane %v2130, 4
      %v2132 = vadd.f32 %v2130, %v2131
      %v2133 = vrot.slane %v2132, 2
      %v2134 = vadd.f32 %v2132, %v2133
      %v2135 = vrot.slane %v2134, 1
      %v2136 = vadd.f32 %v2134, %v2135
      %v2137 = vsel %vm1701, %v2099, 0.0
      %v2138 = vrot.slane %v2137, 4
      %v2139 = vadd.f32 %v2137, %v2138
      %v2140 = vrot.slane %v2139, 2
      %v2141 = vadd.f32 %v2139, %v2140
      %v2142 = vrot.slane %v2141, 1
      %v2143 = vadd.f32 %v2141, %v2142
      %v2144 = vsel %vm1701, %v2100, 0.0
      %v2145 = vrot.slane %v2144, 4
      %v2146 = vadd.f32 %v2144, %v2145
      %v2147 = vrot.slane %v2146, 2
      %v2148 = vadd.f32 %v2146, %v2147
      %v2149 = vrot.slane %v2148, 1
      %v2150 = vadd.f32 %v2148, %v2149
      %v2151 = vsel %vm1701, %v2101, 0.0
      %v2152 = vrot.slane %v2151, 4
      %v2153 = vadd.f32 %v2151, %v2152
      %v2154 = vrot.slane %v2153, 2
      %v2155 = vadd.f32 %v2153, %v2154
      %v2156 = vrot.slane %v2155, 1
      %v2157 = vadd.f32 %v2155, %v2156
      %v2159 = vperm.slane %v1553, 0
      %v2161 = vadd.f32 %v2108, %v2159
      %v2162 = vadd.f32 %v2115, %v2159
      %v2163 = vadd.f32 %v2122, %v2159
      %v2164 = vadd.f32 %v2129, %v2159
      %v2165 = vadd.f32 %v2136, %v2159
      %v2166 = vadd.f32 %v2143, %v2159
      %v2167 = vadd.f32 %v2150, %v2159
      %v2168 = vadd.f32 %v2157, %v2159
      %v2169 = vmax.f32 %v2161, 0.0
      %v2170 = vmax.f32 %v2162, 0.0
      %v2171 = vmax.f32 %v2163, 0.0
      %v2172 = vmax.f32 %v2164, 0.0
      %v2173 = vmax.f32 %v2165, 0.0
      %v2174 = vmax.f32 %v2166, 0.0
      %v2175 = vmax.f32 %v2167, 0.0
      %v2176 = vmax.f32 %v2168, 0.0
      %v2177 = vld [vmem:[%s18] sm:$0xff]
      %v2178 = vld [vmem:[%s18 + $0x8] sm:$0xff]
      %v2179 = vld [vmem:[%s18 + $0x10] sm:$0xff]
      %v2180 = vld [vmem:[%s18 + $0x18] sm:$0xff]
      %v2181 = vld [vmem:[%s18 + $0x20] sm:$0xff]
      %v2182 = vld [vmem:[%s18 + $0x28] sm:$0xff]
      %v2183 = vld [vmem:[%s18 + $0x30] sm:$0xff]
      %v2184 = vld [vmem:[%s18 + $0x38] sm:$0xff]
      %v2185 = vld [vmem:[%s18 + $0x40] sm:$0xff]
      %v2186 = vld [vmem:[%s18 + $0x48] sm:$0xff]
      %v2187 = vld [vmem:[%s18 + $0x50] sm:$0xff]
      %v2188 = vld [vmem:[%s18 + $0x58] sm:$0xff]
      %v2189 = vld [vmem:[%s18 + $0x60] sm:$0xff]
      %v2190 = vld [vmem:[%s18 + $0x68] sm:$0xff]
      %v2191 = vld [vmem:[%s18 + $0x70] sm:$0xf]
      %v2192 = vld [vmem:[%s18 + $0x78] sm:$0xf]
      %v2193 = vld [vmem:[%s18 + $0x80] sm:$0xf]
      %v2194 = vld [vmem:[%s18 + $0x88] sm:$0xf]
      %v2195 = vld [vmem:[%s18 + $0x90] sm:$0xf]
      %v2196 = vld [vmem:[%s18 + $0x98] sm:$0xf]
      %v2197 = vld [vmem:[%s18 + $0xa0] sm:$0xf]
      %v2206 = vrot.slane %v2170, 7
      %v2207 = vsel %vm1566, %v2206, %v2169
      %v2208 = vrot.slane %v2171, 6
      %v2209 = vsel %vm1569, %v2208, %v2207
      %v2210 = vrot.slane %v2172, 5
      %v2211 = vsel %vm1572, %v2210, %v2209
      %v2212 = vrot.slane %v2173, 4
      %v2213 = vsel %vm1575, %v2212, %v2211
      %v2214 = vrot.slane %v2174, 3
      %v2215 = vsel %vm1578, %v2214, %v2213
      %v2216 = vrot.slane %v2175, 2
      %v2217 = vsel %vm1581, %v2216, %v2215
      %v2218 = vrot.slane %v2176, 1
      %v2219 = vsel %vm1584, %v2218, %v2217
      %v2220 = vsel %vm1701, %v2219, 0
      %v2223 = vsel %vm920, %v2191, 0
      %v2226 = vsel %vm920, %v2192, 0
      %v2229 = vsel %vm920, %v2193, 0
      %v2232 = vsel %vm920, %v2194, 0
      %v2235 = vsel %vm920, %v2195, 0
      %v2238 = vsel %vm920, %v2196, 0
      %v2241 = vsel %vm920, %v2197, 0
      %2243 = vmatpush.msra.mxu0 0.0
      %2244 = vmatpush.msra.mxu0 0.0
      %2245 = vmatpush.msra.mxu0 0.0
      %2246 = vmatpush.msra.mxu0 0.0
      %2247 = vmatpush.msra.mxu0 0.0
      %2248 = vmatpush.msra.mxu0 0.0
      %2249 = vmatpush.msra.mxu0 0.0
      %2250 = vmatpush.msra.mxu0 0.0
      %2251 = vmatpush.msra.mxu0 0.0
      %2252 = vmatpush.msra.mxu0 0.0
      %2253 = vmatpush.msra.mxu0 0.0
      %2254 = vmatpush.msra.mxu0 0.0
      %2255 = vmatpush.msra.mxu0 0.0
      %2256 = vmatpush.msra.mxu0 %v2223
      %2257 = vmatpush.msra.mxu0 %v2184
      %2258 = vmatpush.msra.mxu0 %v2177
      %2259 = vmatmul.f32.gmra.mxu0 %v2220
      %v2260 = vpop.f32.mrf.mxu0
      %v2261 = vadd.f32 0.0, %v2260
      %2262 = vdwg.mxu0
      %2263 = vmatpush.msra.mxu0 0.0
      %2264 = vmatpush.msra.mxu0 0.0
      %2265 = vmatpush.msra.mxu0 0.0
      %2266 = vmatpush.msra.mxu0 0.0
      %2267 = vmatpush.msra.mxu0 0.0
      %2268 = vmatpush.msra.mxu0 0.0
      %2269 = vmatpush.msra.mxu0 0.0
      %2270 = vmatpush.msra.mxu0 0.0
      %2271 = vmatpush.msra.mxu0 0.0
      %2272 = vmatpush.msra.mxu0 0.0
      %2273 = vmatpush.msra.mxu0 0.0
      %2274 = vmatpush.msra.mxu0 0.0
      %2275 = vmatpush.msra.mxu0 0.0
      %2276 = vmatpush.msra.mxu0 %v2226
      %2277 = vmatpush.msra.mxu0 %v2185
      %2278 = vmatpush.msra.mxu0 %v2178
      %2279 = vmatmul.f32.gmra.mxu0 %v2220
      %v2280 = vpop.f32.mrf.mxu0
      %v2281 = vadd.f32 0.0, %v2280
      %2282 = vdwg.mxu0
      %2283 = vmatpush.msra.mxu0 0.0
      %2284 = vmatpush.msra.mxu0 0.0
      %2285 = vmatpush.msra.mxu0 0.0
      %2286 = vmatpush.msra.mxu0 0.0
      %2287 = vmatpush.msra.mxu0 0.0
      %2288 = vmatpush.msra.mxu0 0.0
      %2289 = vmatpush.msra.mxu0 0.0
      %2290 = vmatpush.msra.mxu0 0.0
      %2291 = vmatpush.msra.mxu0 0.0
      %2292 = vmatpush.msra.mxu0 0.0
      %2293 = vmatpush.msra.mxu0 0.0
      %2294 = vmatpush.msra.mxu0 0.0
      %2295 = vmatpush.msra.mxu0 0.0
      %2296 = vmatpush.msra.mxu0 %v2229
      %2297 = vmatpush.msra.mxu0 %v2186
      %2298 = vmatpush.msra.mxu0 %v2179
      %2299 = vmatmul.f32.gmra.mxu0 %v2220
      %v2300 = vpop.f32.mrf.mxu0
      %v2301 = vadd.f32 0.0, %v2300
      %2302 = vdwg.mxu0
      %2303 = vmatpush.msra.mxu0 0.0
      %2304 = vmatpush.msra.mxu0 0.0
      %2305 = vmatpush.msra.mxu0 0.0
      %2306 = vmatpush.msra.mxu0 0.0
      %2307 = vmatpush.msra.mxu0 0.0
      %2308 = vmatpush.msra.mxu0 0.0
      %2309 = vmatpush.msra.mxu0 0.0
      %2310 = vmatpush.msra.mxu0 0.0
      %2311 = vmatpush.msra.mxu0 0.0
      %2312 = vmatpush.msra.mxu0 0.0
      %2313 = vmatpush.msra.mxu0 0.0
      %2314 = vmatpush.msra.mxu0 0.0
      %2315 = vmatpush.msra.mxu0 0.0
      %2316 = vmatpush.msra.mxu0 %v2232
      %2317 = vmatpush.msra.mxu0 %v2187
      %2318 = vmatpush.msra.mxu0 %v2180
      %2319 = vmatmul.f32.gmra.mxu0 %v2220
      %v2320 = vpop.f32.mrf.mxu0
      %v2321 = vadd.f32 0.0, %v2320
      %2322 = vdwg.mxu0
      %2323 = vmatpush.msra.mxu0 0.0
      %2324 = vmatpush.msra.mxu0 0.0
      %2325 = vmatpush.msra.mxu0 0.0
      %2326 = vmatpush.msra.mxu0 0.0
      %2327 = vmatpush.msra.mxu0 0.0
      %2328 = vmatpush.msra.mxu0 0.0
      %2329 = vmatpush.msra.mxu0 0.0
      %2330 = vmatpush.msra.mxu0 0.0
      %2331 = vmatpush.msra.mxu0 0.0
      %2332 = vmatpush.msra.mxu0 0.0
      %2333 = vmatpush.msra.mxu0 0.0
      %2334 = vmatpush.msra.mxu0 0.0
      %2335 = vmatpush.msra.mxu0 0.0
      %2336 = vmatpush.msra.mxu0 %v2235
      %2337 = vmatpush.msra.mxu0 %v2188
      %2338 = vmatpush.msra.mxu0 %v2181
      %2339 = vmatmul.f32.gmra.mxu0 %v2220
      %v2340 = vpop.f32.mrf.mxu0
      %v2341 = vadd.f32 0.0, %v2340
      %2342 = vdwg.mxu0
      %2343 = vmatpush.msra.mxu0 0.0
      %2344 = vmatpush.msra.mxu0 0.0
      %2345 = vmatpush.msra.mxu0 0.0
      %2346 = vmatpush.msra.mxu0 0.0
      %2347 = vmatpush.msra.mxu0 0.0
      %2348 = vmatpush.msra.mxu0 0.0
      %2349 = vmatpush.msra.mxu0 0.0
      %2350 = vmatpush.msra.mxu0 0.0
      %2351 = vmatpush.msra.mxu0 0.0
      %2352 = vmatpush.msra.mxu0 0.0
      %2353 = vmatpush.msra.mxu0 0.0
      %2354 = vmatpush.msra.mxu0 0.0
      %2355 = vmatpush.msra.mxu0 0.0
      %2356 = vmatpush.msra.mxu0 %v2238
      %2357 = vmatpush.msra.mxu0 %v2189
      %2358 = vmatpush.msra.mxu0 %v2182
      %2359 = vmatmul.f32.gmra.mxu0 %v2220
      %v2360 = vpop.f32.mrf.mxu0
      %v2361 = vadd.f32 0.0, %v2360
      %2362 = vdwg.mxu0
      %2363 = vmatpush.msra.mxu0 0.0
      %2364 = vmatpush.msra.mxu0 0.0
      %2365 = vmatpush.msra.mxu0 0.0
      %2366 = vmatpush.msra.mxu0 0.0
      %2367 = vmatpush.msra.mxu0 0.0
      %2368 = vmatpush.msra.mxu0 0.0
      %2369 = vmatpush.msra.mxu0 0.0
      %2370 = vmatpush.msra.mxu0 0.0
      %2371 = vmatpush.msra.mxu0 0.0
      %2372 = vmatpush.msra.mxu0 0.0
      %2373 = vmatpush.msra.mxu0 0.0
      %2374 = vmatpush.msra.mxu0 0.0
      %2375 = vmatpush.msra.mxu0 0.0
      %2376 = vmatpush.msra.mxu0 %v2241
      %2377 = vmatpush.msra.mxu0 %v2190
      %2378 = vmatpush.msra.mxu0 %v2183
      %2379 = vmatmul.f32.gmra.mxu0 %v2220
      %v2380 = vpop.f32.mrf.mxu0
      %v2381 = vadd.f32 0.0, %v2380
      %2382 = vdwg.mxu0
      %v2383 = vld [vmem:[%s19] sm:$0xff]
      %v2384 = vld [vmem:[%s19 + $0x8] sm:$0xff]
      %v2385 = vld [vmem:[%s19 + $0x10] sm:$0xff]
      %v2386 = vld [vmem:[%s19 + $0x18] sm:$0xff]
      %v2387 = vld [vmem:[%s19 + $0x20] sm:$0xff]
      %v2388 = vld [vmem:[%s19 + $0x28] sm:$0xff]
      %v2389 = vld [vmem:[%s19 + $0x30] sm:$0xff]
      %v2390 = vmul.f32 %v2261, %v2383
      %v2391 = vmul.f32 %v2281, %v2384
      %v2392 = vmul.f32 %v2301, %v2385
      %v2393 = vmul.f32 %v2321, %v2386
      %v2394 = vmul.f32 %v2341, %v2387
      %v2395 = vmul.f32 %v2361, %v2388
      %v2396 = vmul.f32 %v2381, %v2389
      %v2397 = vrot.slane %v2390, 4
      %v2398 = vadd.f32 %v2390, %v2397
      %v2399 = vrot.slane %v2398, 2
      %v2400 = vadd.f32 %v2398, %v2399
      %v2401 = vrot.slane %v2400, 1
      %v2402 = vadd.f32 %v2400, %v2401
      %v2403 = vrot.slane %v2391, 4
      %v2404 = vadd.f32 %v2391, %v2403
      %v2405 = vrot.slane %v2404, 2
      %v2406 = vadd.f32 %v2404, %v2405
      %v2407 = vrot.slane %v2406, 1
      %v2408 = vadd.f32 %v2406, %v2407
      %v2409 = vrot.slane %v2392, 4
      %v2410 = vadd.f32 %v2392, %v2409
      %v2411 = vrot.slane %v2410, 2
      %v2412 = vadd.f32 %v2410, %v2411
      %v2413 = vrot.slane %v2412, 1
      %v2414 = vadd.f32 %v2412, %v2413
      %v2415 = vrot.slane %v2393, 4
      %v2416 = vadd.f32 %v2393, %v2415
      %v2417 = vrot.slane %v2416, 2
      %v2418 = vadd.f32 %v2416, %v2417
      %v2419 = vrot.slane %v2418, 1
      %v2420 = vadd.f32 %v2418, %v2419
      %v2421 = vrot.slane %v2394, 4
      %v2422 = vadd.f32 %v2394, %v2421
      %v2423 = vrot.slane %v2422, 2
      %v2424 = vadd.f32 %v2422, %v2423
      %v2425 = vrot.slane %v2424, 1
      %v2426 = vadd.f32 %v2424, %v2425
      %v2427 = vrot.slane %v2395, 4
      %v2428 = vadd.f32 %v2395, %v2427
      %v2429 = vrot.slane %v2428, 2
      %v2430 = vadd.f32 %v2428, %v2429
      %v2431 = vrot.slane %v2430, 1
      %v2432 = vadd.f32 %v2430, %v2431
      %vm2433 = vcmask 261120
      %v2434 = vsel %vm2433, %v2396, 0.0
      %v2435 = vrot.slane %v2434, 4
      %v2436 = vadd.f32 %v2434, %v2435
      %v2437 = vrot.slane %v2436, 2
      %v2438 = vadd.f32 %v2436, %v2437
      %v2439 = vrot.slane %v2438, 1
      %v2440 = vadd.f32 %v2438, %v2439
      %2443 = vrot.lane.b32.xlu0 %v2402, 28
      %v2444 = vpop.permute.xlu0 %2443
      %2445 = vrot.lane.b32.xlu0 %v2408, 28
      %v2446 = vpop.permute.xlu0 %2445
      %vm2447 = vcmask 228352
      %v2448 = vsel %vm2447, %v2444, %v2446
      %v2450 = vadd.f32 %v2402, %v2448
      %2452 = vrot.lane.b32.xlu0 %v2408, 56
      %v2453 = vpop.permute.xlu0 %2452
      %2454 = vrot.lane.b32.xlu0 %v2414, 56
      %v2455 = vpop.permute.xlu0 %2454
      %vm2456 = vcmask 457728
      %v2457 = vsel %vm2456, %v2453, %v2455
      %v2459 = vadd.f32 %v2450, %v2457
      %2461 = vrot.lane.b32.xlu0 %v2414, 84
      %v2462 = vpop.permute.xlu0 %2461
      %2463 = vrot.lane.b32.xlu0 %v2420, 84
      %v2464 = vpop.permute.xlu0 %2463
      %vm2465 = vcmask 687104
      %v2466 = vsel %vm2465, %v2462, %v2464
      %v2468 = vadd.f32 %v2459, %v2466
      %2469 = vrot.lane.b32.xlu0 %v2420, 112
      %v2470 = vpop.permute.xlu0 %2469
      %v2472 = vadd.f32 %v2468, %v2470
      %2474 = vrot.lane.b32.xlu0 %v2420, 12
      %v2475 = vpop.permute.xlu0 %2474
      %2476 = vrot.lane.b32.xlu0 %v2426, 12
      %v2477 = vpop.permute.xlu0 %2476
      %vm2478 = vcmask 97280
      %v2479 = vsel %vm2478, %v2475, %v2477
      %v2481 = vadd.f32 %v2472, %v2479
      %2483 = vrot.lane.b32.xlu0 %v2426, 40
      %v2484 = vpop.permute.xlu0 %2483
      %2485 = vrot.lane.b32.xlu0 %v2432, 40
      %v2486 = vpop.permute.xlu0 %2485
      %vm2487 = vcmask 326656
      %v2488 = vsel %vm2487, %v2484, %v2486
      %v2490 = vadd.f32 %v2481, %v2488
      %2492 = vrot.lane.b32.xlu0 %v2432, 68
      %v2493 = vpop.permute.xlu0 %2492
      %2494 = vrot.lane.b32.xlu0 %v2440, 68
      %v2495 = vpop.permute.xlu0 %2494
      %vm2496 = vcmask 556032
      %v2497 = vsel %vm2496, %v2493, %v2495
      %v2499 = vadd.f32 %v2490, %v2497
      %v2500 = vld [vmem:[%s20] sm:$0x1]
      %v2501 = vadd.f32 %v2499, %v2500
      %v2502 = vmax.f32 %v2501, 0.0
      %v2503 = vld [vmem:[%s21] sm:$0xff]
      %v2504 = vld [vmem:[%s21 + $0x8] sm:$0xff]
      %v2505 = vld [vmem:[%s21 + $0x10] sm:$0xff]
      %v2506 = vld [vmem:[%s21 + $0x18] sm:$0xff]
      %v2507 = vld [vmem:[%s21 + $0x20] sm:$0xff]
      %v2508 = vld [vmem:[%s21 + $0x28] sm:$0xff]
      %v2509 = vld [vmem:[%s21 + $0x30] sm:$0xff]
      %v2510 = vld [vmem:[%s21 + $0x38] sm:$0xff]
      %v2511 = vld [vmem:[%s21 + $0x40] sm:$0xff]
      %v2512 = vld [vmem:[%s21 + $0x48] sm:$0xff]
      %v2513 = vld [vmem:[%s21 + $0x50] sm:$0xff]
      %v2514 = vld [vmem:[%s21 + $0x58] sm:$0xff]
      %v2515 = vld [vmem:[%s21 + $0x60] sm:$0xf]
      %v2516 = vld [vmem:[%s22] sm:$0x1]
      %vm2517 = vcmask 818176
      %v2519 = vsel %vm2517, %v2502, 0
      %v2522 = vsel %vm920, %v2515, 0
      %2524 = vmatpush.msra.mxu0 0.0
      %2525 = vmatpush.msra.mxu0 0.0
      %2526 = vmatpush.msra.mxu0 0.0
      %2527 = vmatpush.msra.mxu0 %v2522
      %2528 = vmatpush.msra.mxu0 %v2514
      %2529 = vmatpush.msra.mxu0 %v2513
      %2530 = vmatpush.msra.mxu0 %v2512
      %2531 = vmatpush.msra.mxu0 %v2511
      %2532 = vmatpush.msra.mxu0 %v2510
      %2533 = vmatpush.msra.mxu0 %v2509
      %2534 = vmatpush.msra.mxu0 %v2508
      %2535 = vmatpush.msra.mxu0 %v2507
      %2536 = vmatpush.msra.mxu0 %v2506
      %2537 = vmatpush.msra.mxu0 %v2505
      %2538 = vmatpush.msra.mxu0 %v2504
      %2539 = vmatpush.msra.mxu0 %v2503
      %2540 = vmatmul.f32.gmra.mxu0 %v2519
      %v2541 = vpop.f32.mrf.mxu0
      %v2542 = vadd.f32 %v2516, %v2541
      %2543 = vdwg.mxu0
      %v2544 = vmax.f32 %v2542, 0.0
      %v2545 = vld [vmem:[%s23] sm:$0xff]
      %v2546 = vld [vmem:[%s23 + $0x8] sm:$0x3]
      %v2547 = vld [vmem:[#allocation2] sm:$0x1]
      %vm2548 = vcmask 80896
      %v2550 = vsel %vm2548, %v2544, 0
      %vm2552 = vcmask 1041408
      %v2554 = vsel %vm2552, %v2546, 0
      %2556 = vmatpush.msra.mxu0 0.0
      %2557 = vmatpush.msra.mxu0 0.0
      %2558 = vmatpush.msra.mxu0 0.0
      %2559 = vmatpush.msra.mxu0 0.0
      %2560 = vmatpush.msra.mxu0 0.0
      %2561 = vmatpush.msra.mxu0 0.0
      %2562 = vmatpush.msra.mxu0 0.0
      %2563 = vmatpush.msra.mxu0 0.0
      %2564 = vmatpush.msra.mxu0 0.0
      %2565 = vmatpush.msra.mxu0 0.0
      %2566 = vmatpush.msra.mxu0 0.0
      %2567 = vmatpush.msra.mxu0 0.0
      %2568 = vmatpush.msra.mxu0 0.0
      %2569 = vmatpush.msra.mxu0 0.0
      %2570 = vmatpush.msra.mxu0 %v2554
      %2571 = vmatpush.msra.mxu0 %v2545
      %2572 = vmatmul.f32.gmra.mxu0 %v2550
      %v2573 = vpop.f32.mrf.mxu0
      %v2574 = vadd.f32 %v2547, %v2573
      %2575 = vdwg.mxu0
      %vm2576 = vcmask 0
      %2577 = vst.msk [vmem:[%s779] sm:$0x1] %vm2576, %v2574
      %p2578 = scmp.lt.s32.totalorder %s38, 1
      %s2579 = scalar_select %p2578, %s38, 1
      %s2580 = scalar_lea.vmem %s25, %s2579
      // Predicated region
      $region121: #{tpu_custom_call.1} parent=119 // pred_check
        %p2581 = pneg %p591
      $region122: #{tpu_custom_call.1} parent=119 // pred_check_branch
        %2583 = sbr.rel (%p2581) target = $region124
      $region123: #{tpu_custom_call.1} parent=119 // pred_region
        _
      $region124: #{tpu_custom_call.1} parent=119 // pred_fallthru
        _
    $region120: #{tpu_custom_call.1} parent=5 // pred_fallthru
      _
    %p2584 = scmp.le.s32.totalorder 2, %s33
    // Predicated region
    $region125: #{tpu_custom_call.1} parent=5 // pred_check
      %p2585 = pneg %p2584
    $region126: #{tpu_custom_call.1} parent=5 // pred_check_branch
      %2587 = sbr.rel (%p2585) target = $region128
    $region127: #{tpu_custom_call.1} parent=5 // pred_region
      %s2588 = ssub.s32 %s33, 2
      // Predicated region
      $region129: #{tpu_custom_call.1} parent=127 // pred_check
        %p2589 = pneg %p597
      $region130: #{tpu_custom_call.1} parent=127 // pred_check_branch
        %2591 = sbr.rel (%p2589) target = $region132
      $region131: #{tpu_custom_call.1} parent=127 // pred_region
        %p2592 = scmp.lt.s32.totalorder %s39, 1
        %s2593 = scalar_select %p2592, %s39, 1
        %s2594 = scalar_lea.vmem %s25, %s2593
      $region132: #{tpu_custom_call.1} parent=127 // pred_fallthru
        _
    $region128: #{tpu_custom_call.1} parent=5 // pred_fallthru
      _
  $region6: #{tpu_custom_call.1} parent=0 // loop_footer
    %s37 = sadd.s32 1, %s33
  $region7: #{tpu_custom_call.1} parent=0 // loop_footer_branch
    %32 = sbr.rel target = $region3
  $region8: #{tpu_custom_call.1} parent=0 // loop_exit
    _

</llo_original>
